<compile_context>
chip_gen: v5e
topology: v5e:2x2
jax: 0.10.0
libtpu: 0.0.40
codegen_flags: <defaults>
</compile_context>

<pallas_src>
import functools
import math

import jax
import jax.numpy as jnp
from jax.experimental import pallas as pl
from jax.experimental.pallas import tpu as pltpu


_LAYER0_FMA_MAX_DIN = 8      # use f32 VPU FMAs for layer 0 when dim_in is tiny

_TWO_PI = 6.283185307179586
_INV_2PI = 0.15915494309189535
# Odd polynomial for sin on [-pi/2, pi/2] (Cephes sinf coefficients).
# Max abs error ~9e-5 -- far below the bf16 resolution of the activations that
# are fed to the next MXU matmul, so this is "free" accuracy-wise.
_S3 = -1.6666654611e-1
_S5 = 8.3321608736e-3
_S7 = -1.9515295891e-4


def _round_up(v, m):
    return (v + m - 1) // m * m


# ----------------------------------------------------------------------------
# Fast sine:  sin(2*pi*t), f32 range reduction, polynomial in poly_dtype.
# Shared by the kernel and the mixed-precision reference.
# ----------------------------------------------------------------------------
def _sin_turns(t, poly_dtype):
    t = t.astype(jnp.float32)
    t = t - jnp.floor(t + 0.5)               # -> [-0.5, 0.5] turns
    t = jnp.where(t > 0.25, 0.5 - t, t)      # fold: sin(pi - x) == sin(x)
    t = jnp.where(t < -0.25, -0.5 - t, t)    # -> [-0.25, 0.25] turns
    r = t.astype(poly_dtype) * _TWO_PI       # -> [-pi/2, pi/2] radians
    r2 = r * r
    p = r2 * _S7 + _S5
    p = r2 * p + _S3
    return r + r * (r2 * p)                  # r*(1 + r2*(S3 + r2*(S5 + r2*S7)))


# ----------------------------------------------------------------------------
# Hardware-aware configuration (VMEM budget / bf16 VALU availability).
# ----------------------------------------------------------------------------
def _device_kind():
    try:
        return jax.devices()[0].device_kind.lower()
    except Exception:  # pragma: no cover
        return ""


def _hw_config():
    """Returns (vmem_data_budget_bytes, vmem_limit_bytes, has_bf16_valu)."""
    kind = _device_kind()
    old_gen = any(t in kind for t in ("v2", "v3", "v4", "v5"))
    big_vmem = old_gen or ("v6" in kind)      # 128 MiB VMEM chips
    if big_vmem:
        budget, limit = 80 << 20, 100 << 20
    else:                                     # v7x (64 MiB / TC) or unknown
        budget, limit = 36 << 20, 44 << 20
    return budget, limit, (not old_gen)


def _pick_tile(N, B, Din, H_p, Dout_p, L, budget_bytes, tile_cap=4096):
    """Largest N-tile that keeps the pipelined working set within VMEM budget."""
    lane = 128
    # Double-buffered x & out tiles (lane-padded) + ~6 live f32 temporaries
    # of width H_p inside the fused body.
    per_row = 2 * 4 * _round_up(Din, lane) + 2 * 4 * Dout_p + 6 * 4 * H_p
    # Weight residency (double-buffered worst case) + FiLM params + slack.
    fixed = 2 * (8 * H_p * 4 + (L - 1) * H_p * H_p * 2 + H_p * Dout_p * 2
                 + Dout_p * 4 + 2 * L * H_p * 4) + (2 << 20)
    tile = max((budget_bytes - fixed) // per_row, 256)
    tile = min(tile, tile_cap, _round_up(N, 8))
    tile = max(8, (tile // 8) * 8)
    # v7x has 2 TensorCores (and the pipeline wants several steps): make sure
    # there are a few grid steps when N is large enough.
    while B * (-(-N // tile)) < 4 and tile > 512:
        tile //= 2
    return tile


# ----------------------------------------------------------------------------
# Fused kernel: all Siren layers + final linear for one (batch, N-tile) block.
# ----------------------------------------------------------------------------
def fused_siren_kernel(x_ref, gp_ref, bp_ref, *rest, num_layers, dim_in,
                       layer0_fma, poly_dtype):
    # rest = (wt_0, ..., wt_{L-1}, wt_last, b_last, o_ref)
    wt_refs = rest[:num_layers]
    wlast_ref = rest[num_layers]
    blast_ref = rest[num_layers + 1]
    o_ref = rest[num_layers + 2]

    gp = gp_ref[0]          # (L, H_p) f32   folded  w0*gamma/(2*pi)
    bp = bp_ref[0]          # (L, H_p) f32   folded  w0*(b*gamma+beta)/(2*pi)
    x = x_ref[0]            # (TILE_N, dim_in) f32

    # ---- layer 0: tiny K -> f32 broadcast FMAs on the VPU ------------------
    if layer0_fma:
        wt0 = wt_refs[0][...]                       # (dim_in, H_p) f32
        z = x[:, 0:1] * wt0[0:1, :]
        for k in range(1, dim_in):
            z = z + x[:, k:k + 1] * wt0[k:k + 1, :]
    else:
        z = jnp.dot(x.astype(jnp.bfloat16), wt_refs[0][...],
                    preferred_element_type=jnp.float32)
    h = _sin_turns(z * gp[0:1, :] + bp[0:1, :], poly_dtype)

    # ---- hidden layers 1..L-1: bf16 MXU matmul, f32 FiLM, fast sine --------
    for l in range(1, num_layers):
        z = jnp.dot(h.astype(jnp.bfloat16), wt_refs[l][...],
                    preferred_element_type=jnp.float32)
        h = _sin_turns(z * gp[l:l + 1, :] + bp[l:l + 1, :], poly_dtype)

    # ---- final linear (bf16 MXU, f32 bias add) -----------------------------
    out = jnp.dot(h.astype(jnp.bfloat16), wlast_ref[...],
                  preferred_element_type=jnp.float32)
    o_ref[0] = (out + blast_ref[...]).astype(o_ref.dtype)


# ----------------------------------------------------------------------------
# Wrapper: padding, weight prep, BlockSpecs / grid, single pallas_call.
# ----------------------------------------------------------------------------
def siren_net_forward(params, last_params, x, gamma, beta, *,
                      tile_n=None, poly_dtype=None):
    """x: (B, N, dim_in), gamma/beta: (B, dim_hidden) -> (B, N, dim_out)."""
    f32, bf16 = jnp.float32, jnp.bfloat16

    B, N, Din = x.shape
    L = len(params)
    H = params[0]["wt"].shape[1]
    Dout = last_params["wt"].shape[1]

    H_p = _round_up(H, 128)
    Dout_p = _round_up(Dout, 128)

    budget, vmem_limit, bf16_valu = _hw_config()
    if poly_dtype is None:
        poly_dtype = bf16 if bf16_valu else f32
    if tile_n is None:
        tile = _pick_tile(N, B, Din, H_p, Dout_p, L, budget)
    else:
        tile = max(8, _round_up(min(tile_n, _round_up(N, 8)), 8))
    N_p = _round_up(N, tile)

    # NOTE on padding correctness: gamma/beta/bias are zero-padded, so padded
    # hidden lanes compute sin(0) == 0 in every layer and cannot contaminate
    # real lanes through the next matmul.  Rows >= N in a partially filled tile
    # compute garbage that is sliced off below (wasted work, not a bug).
    x_p = jnp.pad(x.astype(f32), ((0, 0), (0, N_p - N), (0, 0)))
    gamma_p = jnp.pad(gamma.astype(f32), ((0, 0), (0, H_p - H)))
    beta_p = jnp.pad(beta.astype(f32), ((0, 0), (0, H_p - H)))

    # Fold w0, the layer bias and 1/(2*pi) into the FiLM affine (once per call):
    #   sin(w0*((z + b)*gamma + beta)) == sin(2*pi*(z*gp + bp))
    gp_list, bp_list = [], []
    for layer in params:
        b_pad = jnp.pad(layer["b"].astype(f32), (0, H_p - H))
        w0 = layer["w0"]
        gp_list.append(w0 * gamma_p * _INV_2PI)                              # (B, H_p)
        bp_list.append(w0 * (b_pad[None, :] * gamma_p + beta_p) * _INV_2PI)  # (B, H_p)
    gp = jnp.stack(gp_list, axis=1)                                          # (B, L, H_p)
    bp = jnp.stack(bp_list, axis=1)                                          # (B, L, H_p)

    layer0_fma = Din <= _LAYER0_FMA_MAX_DIN

    # Pre-transposed, padded weights (resident in VMEM via constant index_map).
    wts = []
    wt0 = jnp.pad(params[0]["wt"].astype(f32), ((0, 0), (0, H_p - H)))
    wts.append(wt0 if layer0_fma else wt0.astype(bf16))                      # (Din, H_p)
    for layer in params[1:]:
        w = jnp.pad(layer["wt"].astype(f32), ((0, H_p - H), (0, H_p - H)))
        wts.append(w.astype(bf16))                                           # (H_p, H_p)
    wlast = jnp.pad(last_params["wt"].astype(f32),
                    ((0, H_p - H), (0, Dout_p - Dout))).astype(bf16)
    blast = jnp.pad(last_params["b"].astype(f32),
                    (0, Dout_p - Dout)).reshape(1, Dout_p)

    grid = (B, N_p // tile)
    kernel = functools.partial(fused_siren_kernel, num_layers=L, dim_in=Din,
                               layer0_fma=layer0_fma, poly_dtype=poly_dtype)

    def _run(single_buffer_weights):
        # Constant blocks (same index every grid step) don't need the default
        # second pipeline buffer -- single-buffer them to free VMEM headroom.
        const_kwargs = ({"pipeline_mode": pl.Buffered(1)}
                        if single_buffer_weights else {})
        in_specs = [
            pl.BlockSpec((1, tile, Din), lambda b, n: (b, n, 0)),    # x tile
            pl.BlockSpec((1, L, H_p), lambda b, n: (b, 0, 0)),       # gp (folded)
            pl.BlockSpec((1, L, H_p), lambda b, n: (b, 0, 0)),       # bp (folded)
            pl.BlockSpec((Din, H_p), lambda b, n: (0, 0), **const_kwargs),
        ]
        for _ in range(1, L):
            in_specs.append(
                pl.BlockSpec((H_p, H_p), lambda b, n: (0, 0), **const_kwargs))
        in_specs.append(
            pl.BlockSpec((H_p, Dout_p), lambda b, n: (0, 0), **const_kwargs))
        in_specs.append(
            pl.BlockSpec((1, Dout_p), lambda b, n: (0, 0), **const_kwargs))
        out_spec = pl.BlockSpec((1, tile, Dout_p), lambda b, n: (b, n, 0))

        return pl.pallas_call(
            kernel,
            out_shape=jax.ShapeDtypeStruct((B, N_p, Dout_p), x.dtype),
            grid_spec=pltpu.PrefetchScalarGridSpec(
                num_scalar_prefetch=0,
                grid=grid,
                in_specs=in_specs,
                out_specs=out_spec,
            ),
            compiler_params=pltpu.CompilerParams(
                dimension_semantics=("parallel", "parallel"),
                vmem_limit_bytes=vmem_limit,
            ),
        )(x_p, gp, bp, *wts, wlast, blast)

    try:
        out = _run(single_buffer_weights=True)
    except Exception:
        # pl.Buffered(1) unsupported on this jax/backend combo: fall back; the
        # only cost is one redundant VMEM copy of each constant weight block.
        out = _run(single_buffer_weights=False)

    # TODO(synk): Dout is lane-padded 3->128, so the HBM writeback is ~40x the
    # useful bytes; a channel-first (B, Dout, N) output layout (in-kernel XLU
    # transpose) would cut it -- mostly relevant on v5e's lower HBM bandwidth.
    return out[:, :N, :Dout]


# ----------------------------------------------------------------------------
# Parameter construction (deterministic, mimics Siren / nn.Linear init ranges)
# ----------------------------------------------------------------------------
def init_siren_params(key, dim_in, dim_hidden, dim_out, num_layers,
                      w0=1.0, w0_initial=30.0, c=6.0):
    params = []
    for ind in range(num_layers):
        is_first = ind == 0
        layer_w0 = w0_initial if is_first else w0
        layer_dim_in = dim_in if is_first else dim_hidden
        w_std = (1.0 / layer_dim_in) if is_first else \
            math.sqrt(c / layer_dim_in) / layer_w0
        key, kw, kb = jax.random.split(key, 3)
        # weight stored as (dim_in, dim_out) == PyTorch weight (dim_out, dim_in).T
        wt = jax.random.uniform(kw, (layer_dim_in, dim_hidden),
                                minval=-w_std, maxval=w_std, dtype=jnp.float32)
        b = jax.random.uniform(kb, (dim_hidden,),
                               minval=-w_std, maxval=w_std, dtype=jnp.float32)
        params.append({"wt": wt, "b": b, "w0": layer_w0})
    bound = 1.0 / math.sqrt(dim_hidden)
    key, kw, kb = jax.random.split(key, 3)
    wt_last = jax.random.uniform(kw, (dim_hidden, dim_out),
                                 minval=-bound, maxval=bound, dtype=jnp.float32)
    b_last = jax.random.uniform(kb, (dim_out,),
                                minval=-bound, maxval=bound, dtype=jnp.float32)
    return params, {"wt": wt_last, "b": b_last}


# ----------------------------------------------------------------------------
# References
# ----------------------------------------------------------------------------
def siren_net_ref(params, last_params, x, gamma, beta):
    """Exact f32 PyTorch semantics: sin(w0*((x@W.T+b)*gamma + beta))."""
    h = x
    for layer in params:
        out = h @ layer["wt"] + layer["b"]
        out = out * gamma[:, None, :] + beta[:, None, :]
        h = jnp.sin(layer["w0"] * out)
    return h @ last_params["wt"] + last_params["b"]


def siren_net_ref_mixed(params, last_params, x, gamma, beta, poly_dtype):
    """Mirrors the kernel's arithmetic (f32 layer-0 FMAs, bf16 MXU elsewhere,
    folded FiLM affine, same fast-sine approximation) for a tight check."""
    bf16 = jnp.bfloat16
    dim_in = params[0]["wt"].shape[0]
    h = x
    for l, layer in enumerate(params):
        gp = layer["w0"] * gamma * _INV_2PI
        bp = layer["w0"] * (layer["b"][None, :] * gamma + beta) * _INV_2PI
        if l == 0 and dim_in <= _LAYER0_FMA_MAX_DIN:
            wt0 = layer["wt"]
            z = h[..., 0:1] * wt0[0:1, :]
            for k in range(1, dim_in):
                z = z + h[..., k:k + 1] * wt0[k:k + 1, :]
        else:
            z = jnp.einsum("bnk,kh->bnh", h.astype(bf16),
                           layer["wt"].astype(bf16),
                           preferred_element_type=jnp.float32)
        h = _sin_turns(z * gp[:, None, :] + bp[:, None, :], poly_dtype)
    z = jnp.einsum("bnk,kh->bnh", h.astype(bf16),
                   last_params["wt"].astype(bf16),
                   preferred_element_type=jnp.float32)
    return z + last_params["b"]


# ----------------------------------------------------------------------------
if __name__ == "__main__":
    dim_in, dim_hidden, dim_out, num_layers = 3, 32, 3, 3
    B, N = 2, 8

    key = jax.random.PRNGKey(0)
    key, kx, kg, kb = jax.random.split(key, 4)
    x = jax.random.normal(kx, (B, N, dim_in), dtype=jnp.float32)
    gamma = jax.random.normal(kg, (B, dim_hidden), dtype=jnp.float32)
    beta = jax.random.normal(kb, (B, dim_hidden), dtype=jnp.float32)

    params, last_params = init_siren_params(
        key, dim_in, dim_hidden, dim_out, num_layers)

    _, _, bf16_valu = _hw_config()
    poly_dtype = jnp.bfloat16 if bf16_valu else jnp.float32

    out = siren_net_forward(params, last_params, x, gamma, beta,
                            poly_dtype=poly_dtype)
    out = jax.block_until_ready(out)
    assert out.shape == (B, N, dim_out)

    # Tight check vs a reference mirroring the kernel's arithmetic.  When the
    # polynomial runs in bf16, Mosaic/XLA rounding (FMA contraction) can differ
    # by a few bf16 ulps per activation, so the bound is looser in that case.
    ref_mixed = siren_net_ref_mixed(params, last_params, x, gamma, beta,
                                    poly_dtype)
    err_mixed = float(jnp.max(jnp.abs(out - ref_mixed)))
    tight_tol = 1e-1 if jnp.dtype(poly_dtype) == jnp.dtype(jnp.bfloat16) else 3e-3
    assert err_mixed < tight_tol, f"kernel vs mixed-precision reference: {err_mixed}"

    # Coarse semantic check vs exact f32 PyTorch math (bf16 MXU inputs and the
    # bf16-accuracy sine are amplified by w0*gamma through the layers, so only
    # a loose bound is meaningful here).
    ref_f32 = siren_net_ref(params, last_params, x, gamma, beta)
    err_f32 = float(jnp.max(jnp.abs(out - ref_f32)))
    assert err_f32 < 0.75, f"kernel vs f32 reference (bf16 path): {err_f32}"

    print("KERNEL_OK")
</pallas_src>

<mosaic_0001>
module attributes {stable_mosaic.version = 11 : i64} {
  func.func @fused_siren_kernel(%arg0: i32, %arg1: i32, %arg2: memref<1x8x3xf32, #tpu.memory_space<vmem>>, %arg3: memref<1x3x128xf32, #tpu.memory_space<vmem>>, %arg4: memref<1x3x128xf32, #tpu.memory_space<vmem>>, %arg5: memref<3x128xf32, #tpu.memory_space<vmem>>, %arg6: memref<128x128xbf16, #tpu.memory_space<vmem>>, %arg7: memref<128x128xbf16, #tpu.memory_space<vmem>>, %arg8: memref<128x128xbf16, #tpu.memory_space<vmem>>, %arg9: memref<1x128xf32, #tpu.memory_space<vmem>>, %arg10: memref<1x8x128xf32, #tpu.memory_space<vmem>>) attributes {dimension_semantics = [#tpu.dimension_semantics<parallel>, #tpu.dimension_semantics<parallel>], iteration_bounds = array<i64: 2, 1>, scalar_prefetch = 0 : i64, scratch_operands = 0 : i64, tpu.core_type = #tpu.core_type<tc>, window_params = [{transform_indices = @transform_0, window_bounds = array<i64: 1, 8, 3>}, {transform_indices = @transform_1, window_bounds = array<i64: 1, 3, 128>}, {transform_indices = @transform_2, window_bounds = array<i64: 1, 3, 128>}, {pipeline_mode = #tpu.pipeline_mode<synchronous>, transform_indices = @transform_3, window_bounds = array<i64: 3, 128>}, {pipeline_mode = #tpu.pipeline_mode<synchronous>, transform_indices = @transform_4, window_bounds = array<i64: 128, 128>}, {pipeline_mode = #tpu.pipeline_mode<synchronous>, transform_indices = @transform_5, window_bounds = array<i64: 128, 128>}, {pipeline_mode = #tpu.pipeline_mode<synchronous>, transform_indices = @transform_6, window_bounds = array<i64: 128, 128>}, {pipeline_mode = #tpu.pipeline_mode<synchronous>, transform_indices = @transform_7, window_bounds = array<i64: 1, 128>}, {transform_indices = @transform_8, window_bounds = array<i64: 1, 8, 128>}]} {
    %c0 = arith.constant 0 : index
    %c0_0 = arith.constant 0 : index
    %c0_1 = arith.constant 0 : index
    %0 = vector.load %arg3[%c0, %c0_0, %c0_1] : memref<1x3x128xf32, #tpu.memory_space<vmem>>, vector<1x3x128xf32>
    %1 = vector.shape_cast %0 : vector<1x3x128xf32> to vector<3x128xf32>
    %c0_2 = arith.constant 0 : index
    %c0_3 = arith.constant 0 : index
    %c0_4 = arith.constant 0 : index
    %2 = vector.load %arg4[%c0_2, %c0_3, %c0_4] : memref<1x3x128xf32, #tpu.memory_space<vmem>>, vector<1x3x128xf32>
    %3 = vector.shape_cast %2 : vector<1x3x128xf32> to vector<3x128xf32>
    %c0_5 = arith.constant 0 : index
    %c0_6 = arith.constant 0 : index
    %c0_7 = arith.constant 0 : index
    %4 = vector.load %arg2[%c0_5, %c0_6, %c0_7] : memref<1x8x3xf32, #tpu.memory_space<vmem>>, vector<1x8x3xf32>
    %5 = vector.shape_cast %4 : vector<1x8x3xf32> to vector<8x3xf32>
    %c0_8 = arith.constant 0 : index
    %c0_9 = arith.constant 0 : index
    %6 = vector.load %arg5[%c0_8, %c0_9] : memref<3x128xf32, #tpu.memory_space<vmem>>, vector<3x128xf32>
    %7 = vector.extract_strided_slice %5 {offsets = [0, 0], sizes = [8, 1], strides = [1, 1]} : vector<8x3xf32> to vector<8x1xf32>
    %8 = vector.extract_strided_slice %6 {offsets = [0, 0], sizes = [1, 128], strides = [1, 1]} : vector<3x128xf32> to vector<1x128xf32>
    %9 = vector.broadcast %7 : vector<8x1xf32> to vector<8x128xf32>
    %10 = vector.broadcast %8 : vector<1x128xf32> to vector<8x128xf32>
    %11 = arith.mulf %9, %10 : vector<8x128xf32>
    %12 = vector.extract_strided_slice %5 {offsets = [0, 1], sizes = [8, 1], strides = [1, 1]} : vector<8x3xf32> to vector<8x1xf32>
    %13 = vector.extract_strided_slice %6 {offsets = [1, 0], sizes = [1, 128], strides = [1, 1]} : vector<3x128xf32> to vector<1x128xf32>
    %14 = vector.broadcast %12 : vector<8x1xf32> to vector<8x128xf32>
    %15 = vector.broadcast %13 : vector<1x128xf32> to vector<8x128xf32>
    %16 = arith.mulf %14, %15 : vector<8x128xf32>
    %17 = arith.addf %11, %16 : vector<8x128xf32>
    %18 = vector.extract_strided_slice %5 {offsets = [0, 2], sizes = [8, 1], strides = [1, 1]} : vector<8x3xf32> to vector<8x1xf32>
    %19 = vector.extract_strided_slice %6 {offsets = [2, 0], sizes = [1, 128], strides = [1, 1]} : vector<3x128xf32> to vector<1x128xf32>
    %20 = vector.broadcast %18 : vector<8x1xf32> to vector<8x128xf32>
    %21 = vector.broadcast %19 : vector<1x128xf32> to vector<8x128xf32>
    %22 = arith.mulf %20, %21 : vector<8x128xf32>
    %23 = arith.addf %17, %22 : vector<8x128xf32>
    %24 = vector.extract_strided_slice %1 {offsets = [0, 0], sizes = [1, 128], strides = [1, 1]} : vector<3x128xf32> to vector<1x128xf32>
    %25 = vector.broadcast %24 : vector<1x128xf32> to vector<8x128xf32>
    %26 = arith.mulf %23, %25 : vector<8x128xf32>
    %27 = vector.extract_strided_slice %3 {offsets = [0, 0], sizes = [1, 128], strides = [1, 1]} : vector<3x128xf32> to vector<1x128xf32>
    %28 = vector.broadcast %27 : vector<1x128xf32> to vector<8x128xf32>
    %29 = arith.addf %26, %28 : vector<8x128xf32>
    %cst = arith.constant 5.000000e-01 : f32
    %30 = vector.broadcast %cst : f32 to vector<8x128xf32>
    %31 = arith.addf %29, %30 : vector<8x128xf32>
    %32 = math.floor %31 : vector<8x128xf32>
    %33 = arith.subf %29, %32 : vector<8x128xf32>
    %cst_10 = arith.constant 2.500000e-01 : f32
    %34 = vector.broadcast %cst_10 : f32 to vector<8x128xf32>
    %35 = arith.cmpf ogt, %33, %34 : vector<8x128xf32>
    %cst_11 = arith.constant 5.000000e-01 : f32
    %36 = vector.broadcast %cst_11 : f32 to vector<8x128xf32>
    %37 = arith.subf %36, %33 : vector<8x128xf32>
    %38 = arith.select %35, %37, %33 : vector<8x128xi1>, vector<8x128xf32>
    %cst_12 = arith.constant -2.500000e-01 : f32
    %39 = vector.broadcast %cst_12 : f32 to vector<8x128xf32>
    %40 = arith.cmpf olt, %38, %39 : vector<8x128xf32>
    %cst_13 = arith.constant -5.000000e-01 : f32
    %41 = vector.broadcast %cst_13 : f32 to vector<8x128xf32>
    %42 = arith.subf %41, %38 : vector<8x128xf32>
    %43 = arith.select %40, %42, %38 : vector<8x128xi1>, vector<8x128xf32>
    %44 = arith.truncf %43 : vector<8x128xf32> to vector<8x128xbf16>
    %cst_14 = arith.constant 6.281250e+00 : bf16
    %45 = vector.broadcast %cst_14 : bf16 to vector<8x128xbf16>
    %46 = arith.mulf %44, %45 : vector<8x128xbf16>
    %47 = arith.mulf %46, %46 : vector<8x128xbf16>
    %cst_15 = arith.constant -1.955030e-04 : bf16
    %48 = vector.broadcast %cst_15 : bf16 to vector<8x128xbf16>
    %49 = arith.mulf %47, %48 : vector<8x128xbf16>
    %cst_16 = arith.constant 8.361810e-03 : bf16
    %50 = vector.broadcast %cst_16 : bf16 to vector<8x128xbf16>
    %51 = arith.addf %49, %50 : vector<8x128xbf16>
    %52 = arith.mulf %47, %51 : vector<8x128xbf16>
    %cst_17 = arith.constant -1.669920e-01 : bf16
    %53 = vector.broadcast %cst_17 : bf16 to vector<8x128xbf16>
    %54 = arith.addf %52, %53 : vector<8x128xbf16>
    %55 = arith.mulf %47, %54 : vector<8x128xbf16>
    %56 = arith.mulf %46, %55 : vector<8x128xbf16>
    %57 = arith.addf %46, %56 : vector<8x128xbf16>
    %c0_18 = arith.constant 0 : index
    %c0_19 = arith.constant 0 : index
    %58 = vector.load %arg6[%c0_18, %c0_19] : memref<128x128xbf16, #tpu.memory_space<vmem>>, vector<128x128xbf16>
    %cst_20 = arith.constant dense<0.000000e+00> : vector<8x128xf32>
    %59 = tpu.matmul %57, %58, %cst_20 {dimension_numbers = #tpu.dot_dimension_numbers<[1], [0], [0], [1], [0, 0, 1, 1], [], []>} : vector<8x128xbf16>, vector<128x128xbf16>, vector<8x128xf32> -> vector<8x128xf32>
    %60 = vector.extract_strided_slice %1 {offsets = [1, 0], sizes = [1, 128], strides = [1, 1]} : vector<3x128xf32> to vector<1x128xf32>
    %61 = vector.broadcast %60 : vector<1x128xf32> to vector<8x128xf32>
    %62 = arith.mulf %59, %61 : vector<8x128xf32>
    %63 = vector.extract_strided_slice %3 {offsets = [1, 0], sizes = [1, 128], strides = [1, 1]} : vector<3x128xf32> to vector<1x128xf32>
    %64 = vector.broadcast %63 : vector<1x128xf32> to vector<8x128xf32>
    %65 = arith.addf %62, %64 : vector<8x128xf32>
    %cst_21 = arith.constant 5.000000e-01 : f32
    %66 = vector.broadcast %cst_21 : f32 to vector<8x128xf32>
    %67 = arith.addf %65, %66 : vector<8x128xf32>
    %68 = math.floor %67 : vector<8x128xf32>
    %69 = arith.subf %65, %68 : vector<8x128xf32>
    %cst_22 = arith.constant 2.500000e-01 : f32
    %70 = vector.broadcast %cst_22 : f32 to vector<8x128xf32>
    %71 = arith.cmpf ogt, %69, %70 : vector<8x128xf32>
    %cst_23 = arith.constant 5.000000e-01 : f32
    %72 = vector.broadcast %cst_23 : f32 to vector<8x128xf32>
    %73 = arith.subf %72, %69 : vector<8x128xf32>
    %74 = arith.select %71, %73, %69 : vector<8x128xi1>, vector<8x128xf32>
    %cst_24 = arith.constant -2.500000e-01 : f32
    %75 = vector.broadcast %cst_24 : f32 to vector<8x128xf32>
    %76 = arith.cmpf olt, %74, %75 : vector<8x128xf32>
    %cst_25 = arith.constant -5.000000e-01 : f32
    %77 = vector.broadcast %cst_25 : f32 to vector<8x128xf32>
    %78 = arith.subf %77, %74 : vector<8x128xf32>
    %79 = arith.select %76, %78, %74 : vector<8x128xi1>, vector<8x128xf32>
    %80 = arith.truncf %79 : vector<8x128xf32> to vector<8x128xbf16>
    %cst_26 = arith.constant 6.281250e+00 : bf16
    %81 = vector.broadcast %cst_26 : bf16 to vector<8x128xbf16>
    %82 = arith.mulf %80, %81 : vector<8x128xbf16>
    %83 = arith.mulf %82, %82 : vector<8x128xbf16>
    %cst_27 = arith.constant -1.955030e-04 : bf16
    %84 = vector.broadcast %cst_27 : bf16 to vector<8x128xbf16>
    %85 = arith.mulf %83, %84 : vector<8x128xbf16>
    %cst_28 = arith.constant 8.361810e-03 : bf16
    %86 = vector.broadcast %cst_28 : bf16 to vector<8x128xbf16>
    %87 = arith.addf %85, %86 : vector<8x128xbf16>
    %88 = arith.mulf %83, %87 : vector<8x128xbf16>
    %cst_29 = arith.constant -1.669920e-01 : bf16
    %89 = vector.broadcast %cst_29 : bf16 to vector<8x128xbf16>
    %90 = arith.addf %88, %89 : vector<8x128xbf16>
    %91 = arith.mulf %83, %90 : vector<8x128xbf16>
    %92 = arith.mulf %82, %91 : vector<8x128xbf16>
    %93 = arith.addf %82, %92 : vector<8x128xbf16>
    %c0_30 = arith.constant 0 : index
    %c0_31 = arith.constant 0 : index
    %94 = vector.load %arg7[%c0_30, %c0_31] : memref<128x128xbf16, #tpu.memory_space<vmem>>, vector<128x128xbf16>
    %cst_32 = arith.constant dense<0.000000e+00> : vector<8x128xf32>
    %95 = tpu.matmul %93, %94, %cst_32 {dimension_numbers = #tpu.dot_dimension_numbers<[1], [0], [0], [1], [0, 0, 1, 1], [], []>} : vector<8x128xbf16>, vector<128x128xbf16>, vector<8x128xf32> -> vector<8x128xf32>
    %96 = vector.extract_strided_slice %1 {offsets = [2, 0], sizes = [1, 128], strides = [1, 1]} : vector<3x128xf32> to vector<1x128xf32>
    %97 = vector.broadcast %96 : vector<1x128xf32> to vector<8x128xf32>
    %98 = arith.mulf %95, %97 : vector<8x128xf32>
    %99 = vector.extract_strided_slice %3 {offsets = [2, 0], sizes = [1, 128], strides = [1, 1]} : vector<3x128xf32> to vector<1x128xf32>
    %100 = vector.broadcast %99 : vector<1x128xf32> to vector<8x128xf32>
    %101 = arith.addf %98, %100 : vector<8x128xf32>
    %cst_33 = arith.constant 5.000000e-01 : f32
    %102 = vector.broadcast %cst_33 : f32 to vector<8x128xf32>
    %103 = arith.addf %101, %102 : vector<8x128xf32>
    %104 = math.floor %103 : vector<8x128xf32>
    %105 = arith.subf %101, %104 : vector<8x128xf32>
    %cst_34 = arith.constant 2.500000e-01 : f32
    %106 = vector.broadcast %cst_34 : f32 to vector<8x128xf32>
    %107 = arith.cmpf ogt, %105, %106 : vector<8x128xf32>
    %cst_35 = arith.constant 5.000000e-01 : f32
    %108 = vector.broadcast %cst_35 : f32 to vector<8x128xf32>
    %109 = arith.subf %108, %105 : vector<8x128xf32>
    %110 = arith.select %107, %109, %105 : vector<8x128xi1>, vector<8x128xf32>
    %cst_36 = arith.constant -2.500000e-01 : f32
    %111 = vector.broadcast %cst_36 : f32 to vector<8x128xf32>
    %112 = arith.cmpf olt, %110, %111 : vector<8x128xf32>
    %cst_37 = arith.constant -5.000000e-01 : f32
    %113 = vector.broadcast %cst_37 : f32 to vector<8x128xf32>
    %114 = arith.subf %113, %110 : vector<8x128xf32>
    %115 = arith.select %112, %114, %110 : vector<8x128xi1>, vector<8x128xf32>
    %116 = arith.truncf %115 : vector<8x128xf32> to vector<8x128xbf16>
    %cst_38 = arith.constant 6.281250e+00 : bf16
    %117 = vector.broadcast %cst_38 : bf16 to vector<8x128xbf16>
    %118 = arith.mulf %116, %117 : vector<8x128xbf16>
    %119 = arith.mulf %118, %118 : vector<8x128xbf16>
    %cst_39 = arith.constant -1.955030e-04 : bf16
    %120 = vector.broadcast %cst_39 : bf16 to vector<8x128xbf16>
    %121 = arith.mulf %119, %120 : vector<8x128xbf16>
    %cst_40 = arith.constant 8.361810e-03 : bf16
    %122 = vector.broadcast %cst_40 : bf16 to vector<8x128xbf16>
    %123 = arith.addf %121, %122 : vector<8x128xbf16>
    %124 = arith.mulf %119, %123 : vector<8x128xbf16>
    %cst_41 = arith.constant -1.669920e-01 : bf16
    %125 = vector.broadcast %cst_41 : bf16 to vector<8x128xbf16>
    %126 = arith.addf %124, %125 : vector<8x128xbf16>
    %127 = arith.mulf %119, %126 : vector<8x128xbf16>
    %128 = arith.mulf %118, %127 : vector<8x128xbf16>
    %129 = arith.addf %118, %128 : vector<8x128xbf16>
    %c0_42 = arith.constant 0 : index
    %c0_43 = arith.constant 0 : index
    %130 = vector.load %arg8[%c0_42, %c0_43] : memref<128x128xbf16, #tpu.memory_space<vmem>>, vector<128x128xbf16>
    %cst_44 = arith.constant dense<0.000000e+00> : vector<8x128xf32>
    %131 = tpu.matmul %129, %130, %cst_44 {dimension_numbers = #tpu.dot_dimension_numbers<[1], [0], [0], [1], [0, 0, 1, 1], [], []>} : vector<8x128xbf16>, vector<128x128xbf16>, vector<8x128xf32> -> vector<8x128xf32>
    %c0_45 = arith.constant 0 : index
    %c0_46 = arith.constant 0 : index
    %132 = vector.load %arg9[%c0_45, %c0_46] : memref<1x128xf32, #tpu.memory_space<vmem>>, vector<1x128xf32>
    %133 = vector.broadcast %132 : vector<1x128xf32> to vector<8x128xf32>
    %134 = arith.addf %131, %133 : vector<8x128xf32>
    %c0_47 = arith.constant 0 : index
    %c0_48 = arith.constant 0 : index
    %c0_49 = arith.constant 0 : index
    %135 = vector.load %arg10[%c0_47, %c0_48, %c0_49] : memref<1x8x128xf32, #tpu.memory_space<vmem>>, vector<1x8x128xf32>
    %136 = vector.shape_cast %135 : vector<1x8x128xf32> to vector<8x128xf32>
    %137 = vector.shape_cast %134 : vector<8x128xf32> to vector<1x8x128xf32>
    tpu.vector_store %arg10[%c0_47, %c0_48, %c0_49], %137 {strides = array<i32>} : memref<1x8x128xf32, #tpu.memory_space<vmem>>, vector<1x8x128xf32>,
    return
  }
  func.func @transform_0(%arg0: i32, %arg1: i32) -> (i32, i32, i32) {
    %c0_i32 = arith.constant 0 : i32
    %c0_i32_0 = arith.constant 0 : i32
    return %arg0, %arg1, %c0_i32 : i32, i32, i32
  }
  func.func @transform_1(%arg0: i32, %arg1: i32) -> (i32, i32, i32) {
    %c0_i32 = arith.constant 0 : i32
    %c0_i32_0 = arith.constant 0 : i32
    %c0_i32_1 = arith.constant 0 : i32
    return %arg0, %c0_i32, %c0_i32_0 : i32, i32, i32
  }
  func.func @transform_2(%arg0: i32, %arg1: i32) -> (i32, i32, i32) {
    %c0_i32 = arith.constant 0 : i32
    %c0_i32_0 = arith.constant 0 : i32
    %c0_i32_1 = arith.constant 0 : i32
    return %arg0, %c0_i32, %c0_i32_0 : i32, i32, i32
  }
  func.func @transform_3(%arg0: i32, %arg1: i32) -> (i32, i32) {
    %c0_i32 = arith.constant 0 : i32
    %c0_i32_0 = arith.constant 0 : i32
    %c0_i32_1 = arith.constant 0 : i32
    return %c0_i32, %c0_i32_0 : i32, i32
  }
  func.func @transform_4(%arg0: i32, %arg1: i32) -> (i32, i32) {
    %c0_i32 = arith.constant 0 : i32
    %c0_i32_0 = arith.constant 0 : i32
    %c0_i32_1 = arith.constant 0 : i32
    return %c0_i32, %c0_i32_0 : i32, i32
  }
  func.func @transform_5(%arg0: i32, %arg1: i32) -> (i32, i32) {
    %c0_i32 = arith.constant 0 : i32
    %c0_i32_0 = arith.constant 0 : i32
    %c0_i32_1 = arith.constant 0 : i32
    return %c0_i32, %c0_i32_0 : i32, i32
  }
  func.func @transform_6(%arg0: i32, %arg1: i32) -> (i32, i32) {
    %c0_i32 = arith.constant 0 : i32
    %c0_i32_0 = arith.constant 0 : i32
    %c0_i32_1 = arith.constant 0 : i32
    return %c0_i32, %c0_i32_0 : i32, i32
  }
  func.func @transform_7(%arg0: i32, %arg1: i32) -> (i32, i32) {
    %c0_i32 = arith.constant 0 : i32
    %c0_i32_0 = arith.constant 0 : i32
    %c0_i32_1 = arith.constant 0 : i32
    return %c0_i32, %c0_i32_0 : i32, i32
  }
  func.func @transform_8(%arg0: i32, %arg1: i32) -> (i32, i32, i32) {
    %c0_i32 = arith.constant 0 : i32
    %c0_i32_0 = arith.constant 0 : i32
    return %arg0, %arg1, %c0_i32 : i32, i32, i32
  }
}

module attributes {stable_mosaic.version = 11 : i64} {
  func.func @fused_siren_kernel(%arg0: i32, %arg1: i32, %arg2: memref<1x8x3xf32, #tpu.memory_space<vmem>>, %arg3: memref<1x3x128xf32, #tpu.memory_space<vmem>>, %arg4: memref<1x3x128xf32, #tpu.memory_space<vmem>>, %arg5: memref<3x128xf32, #tpu.memory_space<vmem>>, %arg6: memref<128x128xbf16, #tpu.memory_space<vmem>>, %arg7: memref<128x128xbf16, #tpu.memory_space<vmem>>, %arg8: memref<128x128xbf16, #tpu.memory_space<vmem>>, %arg9: memref<1x128xf32, #tpu.memory_space<vmem>>, %arg10: memref<1x8x128xf32, #tpu.memory_space<vmem>>) attributes {dimension_semantics = [#tpu.dimension_semantics<parallel>, #tpu.dimension_semantics<parallel>], iteration_bounds = array<i64: 2, 1>, scalar_prefetch = 0 : i64, scratch_operands = 0 : i64, tpu.core_type = #tpu.core_type<tc>, window_params = [{transform_indices = @transform_0, window_bounds = array<i64: 1, 8, 3>}, {transform_indices = @transform_1, window_bounds = array<i64: 1, 3, 128>}, {transform_indices = @transform_2, window_bounds = array<i64: 1, 3, 128>}, {pipeline_mode = #tpu.pipeline_mode<synchronous>, transform_indices = @transform_3, window_bounds = array<i64: 3, 128>}, {pipeline_mode = #tpu.pipeline_mode<synchronous>, transform_indices = @transform_4, window_bounds = array<i64: 128, 128>}, {pipeline_mode = #tpu.pipeline_mode<synchronous>, transform_indices = @transform_5, window_bounds = array<i64: 128, 128>}, {pipeline_mode = #tpu.pipeline_mode<synchronous>, transform_indices = @transform_6, window_bounds = array<i64: 128, 128>}, {pipeline_mode = #tpu.pipeline_mode<synchronous>, transform_indices = @transform_7, window_bounds = array<i64: 1, 128>}, {transform_indices = @transform_8, window_bounds = array<i64: 1, 8, 128>}]} {
    %c0 = arith.constant 0 : index
    %c0_0 = arith.constant 0 : index
    %c0_1 = arith.constant 0 : index
    %0 = vector.load %arg3[%c0, %c0_0, %c0_1] : memref<1x3x128xf32, #tpu.memory_space<vmem>>, vector<1x3x128xf32>
    %1 = vector.shape_cast %0 : vector<1x3x128xf32> to vector<3x128xf32>
    %c0_2 = arith.constant 0 : index
    %c0_3 = arith.constant 0 : index
    %c0_4 = arith.constant 0 : index
    %2 = vector.load %arg4[%c0_2, %c0_3, %c0_4] : memref<1x3x128xf32, #tpu.memory_space<vmem>>, vector<1x3x128xf32>
    %3 = vector.shape_cast %2 : vector<1x3x128xf32> to vector<3x128xf32>
    %c0_5 = arith.constant 0 : index
    %c0_6 = arith.constant 0 : index
    %c0_7 = arith.constant 0 : index
    %4 = vector.load %arg2[%c0_5, %c0_6, %c0_7] : memref<1x8x3xf32, #tpu.memory_space<vmem>>, vector<1x8x3xf32>
    %5 = vector.shape_cast %4 : vector<1x8x3xf32> to vector<8x3xf32>
    %c0_8 = arith.constant 0 : index
    %c0_9 = arith.constant 0 : index
    %6 = vector.load %arg5[%c0_8, %c0_9] : memref<3x128xf32, #tpu.memory_space<vmem>>, vector<3x128xf32>
    %7 = vector.extract_strided_slice %5 {offsets = [0, 0], sizes = [8, 1], strides = [1, 1]} : vector<8x3xf32> to vector<8x1xf32>
    %8 = vector.extract_strided_slice %6 {offsets = [0, 0], sizes = [1, 128], strides = [1, 1]} : vector<3x128xf32> to vector<1x128xf32>
    %9 = vector.broadcast %7 : vector<8x1xf32> to vector<8x128xf32>
    %10 = vector.broadcast %8 : vector<1x128xf32> to vector<8x128xf32>
    %11 = arith.mulf %9, %10 : vector<8x128xf32>
    %12 = vector.extract_strided_slice %5 {offsets = [0, 1], sizes = [8, 1], strides = [1, 1]} : vector<8x3xf32> to vector<8x1xf32>
    %13 = vector.extract_strided_slice %6 {offsets = [1, 0], sizes = [1, 128], strides = [1, 1]} : vector<3x128xf32> to vector<1x128xf32>
    %14 = vector.broadcast %12 : vector<8x1xf32> to vector<8x128xf32>
    %15 = vector.broadcast %13 : vector<1x128xf32> to vector<8x128xf32>
    %16 = arith.mulf %14, %15 : vector<8x128xf32>
    %17 = arith.addf %11, %16 : vector<8x128xf32>
    %18 = vector.extract_strided_slice %5 {offsets = [0, 2], sizes = [8, 1], strides = [1, 1]} : vector<8x3xf32> to vector<8x1xf32>
    %19 = vector.extract_strided_slice %6 {offsets = [2, 0], sizes = [1, 128], strides = [1, 1]} : vector<3x128xf32> to vector<1x128xf32>
    %20 = vector.broadcast %18 : vector<8x1xf32> to vector<8x128xf32>
    %21 = vector.broadcast %19 : vector<1x128xf32> to vector<8x128xf32>
    %22 = arith.mulf %20, %21 : vector<8x128xf32>
    %23 = arith.addf %17, %22 : vector<8x128xf32>
    %24 = vector.extract_strided_slice %1 {offsets = [0, 0], sizes = [1, 128], strides = [1, 1]} : vector<3x128xf32> to vector<1x128xf32>
    %25 = vector.broadcast %24 : vector<1x128xf32> to vector<8x128xf32>
    %26 = arith.mulf %23, %25 : vector<8x128xf32>
    %27 = vector.extract_strided_slice %3 {offsets = [0, 0], sizes = [1, 128], strides = [1, 1]} : vector<3x128xf32> to vector<1x128xf32>
    %28 = vector.broadcast %27 : vector<1x128xf32> to vector<8x128xf32>
    %29 = arith.addf %26, %28 : vector<8x128xf32>
    %cst = arith.constant 5.000000e-01 : f32
    %30 = vector.broadcast %cst : f32 to vector<8x128xf32>
    %31 = arith.addf %29, %30 : vector<8x128xf32>
    %32 = math.floor %31 : vector<8x128xf32>
    %33 = arith.subf %29, %32 : vector<8x128xf32>
    %cst_10 = arith.constant 2.500000e-01 : f32
    %34 = vector.broadcast %cst_10 : f32 to vector<8x128xf32>
    %35 = arith.cmpf ogt, %33, %34 : vector<8x128xf32>
    %cst_11 = arith.constant 5.000000e-01 : f32
    %36 = vector.broadcast %cst_11 : f32 to vector<8x128xf32>
    %37 = arith.subf %36, %33 : vector<8x128xf32>
    %38 = arith.select %35, %37, %33 : vector<8x128xi1>, vector<8x128xf32>
    %cst_12 = arith.constant -2.500000e-01 : f32
    %39 = vector.broadcast %cst_12 : f32 to vector<8x128xf32>
    %40 = arith.cmpf olt, %38, %39 : vector<8x128xf32>
    %cst_13 = arith.constant -5.000000e-01 : f32
    %41 = vector.broadcast %cst_13 : f32 to vector<8x128xf32>
    %42 = arith.subf %41, %38 : vector<8x128xf32>
    %43 = arith.select %40, %42, %38 : vector<8x128xi1>, vector<8x128xf32>
    %44 = arith.truncf %43 : vector<8x128xf32> to vector<8x128xbf16>
    %cst_14 = arith.constant 6.281250e+00 : bf16
    %45 = vector.broadcast %cst_14 : bf16 to vector<8x128xbf16>
    %46 = arith.mulf %44, %45 : vector<8x128xbf16>
    %47 = arith.mulf %46, %46 : vector<8x128xbf16>
    %cst_15 = arith.constant -1.955030e-04 : bf16
    %48 = vector.broadcast %cst_15 : bf16 to vector<8x128xbf16>
    %49 = arith.mulf %47, %48 : vector<8x128xbf16>
    %cst_16 = arith.constant 8.361810e-03 : bf16
    %50 = vector.broadcast %cst_16 : bf16 to vector<8x128xbf16>
    %51 = arith.addf %49, %50 : vector<8x128xbf16>
    %52 = arith.mulf %47, %51 : vector<8x128xbf16>
    %cst_17 = arith.constant -1.669920e-01 : bf16
    %53 = vector.broadcast %cst_17 : bf16 to vector<8x128xbf16>
    %54 = arith.addf %52, %53 : vector<8x128xbf16>
    %55 = arith.mulf %47, %54 : vector<8x128xbf16>
    %56 = arith.mulf %46, %55 : vector<8x128xbf16>
    %57 = arith.addf %46, %56 : vector<8x128xbf16>
    %c0_18 = arith.constant 0 : index
    %c0_19 = arith.constant 0 : index
    %58 = vector.load %arg6[%c0_18, %c0_19] : memref<128x128xbf16, #tpu.memory_space<vmem>>, vector<128x128xbf16>
    %cst_20 = arith.constant dense<0.000000e+00> : vector<8x128xf32>
    %59 = tpu.matmul %57, %58, %cst_20 {dimension_numbers = #tpu.dot_dimension_numbers<[1], [0], [0], [1], [0, 0, 1, 1], [], []>} : vector<8x128xbf16>, vector<128x128xbf16>, vector<8x128xf32> -> vector<8x128xf32>
    %60 = vector.extract_strided_slice %1 {offsets = [1, 0], sizes = [1, 128], strides = [1, 1]} : vector<3x128xf32> to vector<1x128xf32>
    %61 = vector.broadcast %60 : vector<1x128xf32> to vector<8x128xf32>
    %62 = arith.mulf %59, %61 : vector<8x128xf32>
    %63 = vector.extract_strided_slice %3 {offsets = [1, 0], sizes = [1, 128], strides = [1, 1]} : vector<3x128xf32> to vector<1x128xf32>
    %64 = vector.broadcast %63 : vector<1x128xf32> to vector<8x128xf32>
    %65 = arith.addf %62, %64 : vector<8x128xf32>
    %cst_21 = arith.constant 5.000000e-01 : f32
    %66 = vector.broadcast %cst_21 : f32 to vector<8x128xf32>
    %67 = arith.addf %65, %66 : vector<8x128xf32>
    %68 = math.floor %67 : vector<8x128xf32>
    %69 = arith.subf %65, %68 : vector<8x128xf32>
    %cst_22 = arith.constant 2.500000e-01 : f32
    %70 = vector.broadcast %cst_22 : f32 to vector<8x128xf32>
    %71 = arith.cmpf ogt, %69, %70 : vector<8x128xf32>
    %cst_23 = arith.constant 5.000000e-01 : f32
    %72 = vector.broadcast %cst_23 : f32 to vector<8x128xf32>
    %73 = arith.subf %72, %69 : vector<8x128xf32>
    %74 = arith.select %71, %73, %69 : vector<8x128xi1>, vector<8x128xf32>
    %cst_24 = arith.constant -2.500000e-01 : f32
    %75 = vector.broadcast %cst_24 : f32 to vector<8x128xf32>
    %76 = arith.cmpf olt, %74, %75 : vector<8x128xf32>
    %cst_25 = arith.constant -5.000000e-01 : f32
    %77 = vector.broadcast %cst_25 : f32 to vector<8x128xf32>
    %78 = arith.subf %77, %74 : vector<8x128xf32>
    %79 = arith.select %76, %78, %74 : vector<8x128xi1>, vector<8x128xf32>
    %80 = arith.truncf %79 : vector<8x128xf32> to vector<8x128xbf16>
    %cst_26 = arith.constant 6.281250e+00 : bf16
    %81 = vector.broadcast %cst_26 : bf16 to vector<8x128xbf16>
    %82 = arith.mulf %80, %81 : vector<8x128xbf16>
    %83 = arith.mulf %82, %82 : vector<8x128xbf16>
    %cst_27 = arith.constant -1.955030e-04 : bf16
    %84 = vector.broadcast %cst_27 : bf16 to vector<8x128xbf16>
    %85 = arith.mulf %83, %84 : vector<8x128xbf16>
    %cst_28 = arith.constant 8.361810e-03 : bf16
    %86 = vector.broadcast %cst_28 : bf16 to vector<8x128xbf16>
    %87 = arith.addf %85, %86 : vector<8x128xbf16>
    %88 = arith.mulf %83, %87 : vector<8x128xbf16>
    %cst_29 = arith.constant -1.669920e-01 : bf16
    %89 = vector.broadcast %cst_29 : bf16 to vector<8x128xbf16>
    %90 = arith.addf %88, %89 : vector<8x128xbf16>
    %91 = arith.mulf %83, %90 : vector<8x128xbf16>
    %92 = arith.mulf %82, %91 : vector<8x128xbf16>
    %93 = arith.addf %82, %92 : vector<8x128xbf16>
    %c0_30 = arith.constant 0 : index
    %c0_31 = arith.constant 0 : index
    %94 = vector.load %arg7[%c0_30, %c0_31] : memref<128x128xbf16, #tpu.memory_space<vmem>>, vector<128x128xbf16>
    %cst_32 = arith.constant dense<0.000000e+00> : vector<8x128xf32>
    %95 = tpu.matmul %93, %94, %cst_32 {dimension_numbers = #tpu.dot_dimension_numbers<[1], [0], [0], [1], [0, 0, 1, 1], [], []>} : vector<8x128xbf16>, vector<128x128xbf16>, vector<8x128xf32> -> vector<8x128xf32>
    %96 = vector.extract_strided_slice %1 {offsets = [2, 0], sizes = [1, 128], strides = [1, 1]} : vector<3x128xf32> to vector<1x128xf32>
    %97 = vector.broadcast %96 : vector<1x128xf32> to vector<8x128xf32>
    %98 = arith.mulf %95, %97 : vector<8x128xf32>
    %99 = vector.extract_strided_slice %3 {offsets = [2, 0], sizes = [1, 128], strides = [1, 1]} : vector<3x128xf32> to vector<1x128xf32>
    %100 = vector.broadcast %99 : vector<1x128xf32> to vector<8x128xf32>
    %101 = arith.addf %98, %100 : vector<8x128xf32>
    %cst_33 = arith.constant 5.000000e-01 : f32
    %102 = vector.broadcast %cst_33 : f32 to vector<8x128xf32>
    %103 = arith.addf %101, %102 : vector<8x128xf32>
    %104 = math.floor %103 : vector<8x128xf32>
    %105 = arith.subf %101, %104 : vector<8x128xf32>
    %cst_34 = arith.constant 2.500000e-01 : f32
    %106 = vector.broadcast %cst_34 : f32 to vector<8x128xf32>
    %107 = arith.cmpf ogt, %105, %106 : vector<8x128xf32>
    %cst_35 = arith.constant 5.000000e-01 : f32
    %108 = vector.broadcast %cst_35 : f32 to vector<8x128xf32>
    %109 = arith.subf %108, %105 : vector<8x128xf32>
    %110 = arith.select %107, %109, %105 : vector<8x128xi1>, vector<8x128xf32>
    %cst_36 = arith.constant -2.500000e-01 : f32
    %111 = vector.broadcast %cst_36 : f32 to vector<8x128xf32>
    %112 = arith.cmpf olt, %110, %111 : vector<8x128xf32>
    %cst_37 = arith.constant -5.000000e-01 : f32
    %113 = vector.broadcast %cst_37 : f32 to vector<8x128xf32>
    %114 = arith.subf %113, %110 : vector<8x128xf32>
    %115 = arith.select %112, %114, %110 : vector<8x128xi1>, vector<8x128xf32>
    %116 = arith.truncf %115 : vector<8x128xf32> to vector<8x128xbf16>
    %cst_38 = arith.constant 6.281250e+00 : bf16
    %117 = vector.broadcast %cst_38 : bf16 to vector<8x128xbf16>
    %118 = arith.mulf %116, %117 : vector<8x128xbf16>
    %119 = arith.mulf %118, %118 : vector<8x128xbf16>
    %cst_39 = arith.constant -1.955030e-04 : bf16
    %120 = vector.broadcast %cst_39 : bf16 to vector<8x128xbf16>
    %121 = arith.mulf %119, %120 : vector<8x128xbf16>
    %cst_40 = arith.constant 8.361810e-03 : bf16
    %122 = vector.broadcast %cst_40 : bf16 to vector<8x128xbf16>
    %123 = arith.addf %121, %122 : vector<8x128xbf16>
    %124 = arith.mulf %119, %123 : vector<8x128xbf16>
    %cst_41 = arith.constant -1.669920e-01 : bf16
    %125 = vector.broadcast %cst_41 : bf16 to vector<8x128xbf16>
    %126 = arith.addf %124, %125 : vector<8x128xbf16>
    %127 = arith.mulf %119, %126 : vector<8x128xbf16>
    %128 = arith.mulf %118, %127 : vector<8x128xbf16>
    %129 = arith.addf %118, %128 : vector<8x128xbf16>
    %c0_42 = arith.constant 0 : index
    %c0_43 = arith.constant 0 : index
    %130 = vector.load %arg8[%c0_42, %c0_43] : memref<128x128xbf16, #tpu.memory_space<vmem>>, vector<128x128xbf16>
    %cst_44 = arith.constant dense<0.000000e+00> : vector<8x128xf32>
    %131 = tpu.matmul %129, %130, %cst_44 {dimension_numbers = #tpu.dot_dimension_numbers<[1], [0], [0], [1], [0, 0, 1, 1], [], []>} : vector<8x128xbf16>, vector<128x128xbf16>, vector<8x128xf32> -> vector<8x128xf32>
    %c0_45 = arith.constant 0 : index
    %c0_46 = arith.constant 0 : index
    %132 = vector.load %arg9[%c0_45, %c0_46] : memref<1x128xf32, #tpu.memory_space<vmem>>, vector<1x128xf32>
    %133 = vector.broadcast %132 : vector<1x128xf32> to vector<8x128xf32>
    %134 = arith.addf %131, %133 : vector<8x128xf32>
    %c0_47 = arith.constant 0 : index
    %c0_48 = arith.constant 0 : index
    %c0_49 = arith.constant 0 : index
    %135 = vector.load %arg10[%c0_47, %c0_48, %c0_49] : memref<1x8x128xf32, #tpu.memory_space<vmem>>, vector<1x8x128xf32>
    %136 = vector.shape_cast %135 : vector<1x8x128xf32> to vector<8x128xf32>
    %137 = vector.shape_cast %134 : vector<8x128xf32> to vector<1x8x128xf32>
    tpu.vector_store %arg10[%c0_47, %c0_48, %c0_49], %137 {strides = array<i32>} : memref<1x8x128xf32, #tpu.memory_space<vmem>>, vector<1x8x128xf32>,
    return
  }
  func.func @transform_0(%arg0: i32, %arg1: i32) -> (i32, i32, i32) {
    %c0_i32 = arith.constant 0 : i32
    %c0_i32_0 = arith.constant 0 : i32
    return %arg0, %arg1, %c0_i32 : i32, i32, i32
  }
  func.func @transform_1(%arg0: i32, %arg1: i32) -> (i32, i32, i32) {
    %c0_i32 = arith.constant 0 : i32
    %c0_i32_0 = arith.constant 0 : i32
    %c0_i32_1 = arith.constant 0 : i32
    return %arg0, %c0_i32, %c0_i32_0 : i32, i32, i32
  }
  func.func @transform_2(%arg0: i32, %arg1: i32) -> (i32, i32, i32) {
    %c0_i32 = arith.constant 0 : i32
    %c0_i32_0 = arith.constant 0 : i32
    %c0_i32_1 = arith.constant 0 : i32
    return %arg0, %c0_i32, %c0_i32_0 : i32, i32, i32
  }
  func.func @transform_3(%arg0: i32, %arg1: i32) -> (i32, i32) {
    %c0_i32 = arith.constant 0 : i32
    %c0_i32_0 = arith.constant 0 : i32
    %c0_i32_1 = arith.constant 0 : i32
    return %c0_i32, %c0_i32_0 : i32, i32
  }
  func.func @transform_4(%arg0: i32, %arg1: i32) -> (i32, i32) {
    %c0_i32 = arith.constant 0 : i32
    %c0_i32_0 = arith.constant 0 : i32
    %c0_i32_1 = arith.constant 0 : i32
    return %c0_i32, %c0_i32_0 : i32, i32
  }
  func.func @transform_5(%arg0: i32, %arg1: i32) -> (i32, i32) {
    %c0_i32 = arith.constant 0 : i32
    %c0_i32_0 = arith.constant 0 : i32
    %c0_i32_1 = arith.constant 0 : i32
    return %c0_i32, %c0_i32_0 : i32, i32
  }
  func.func @transform_6(%arg0: i32, %arg1: i32) -> (i32, i32) {
    %c0_i32 = arith.constant 0 : i32
    %c0_i32_0 = arith.constant 0 : i32
    %c0_i32_1 = arith.constant 0 : i32
    return %c0_i32, %c0_i32_0 : i32, i32
  }
  func.func @transform_7(%arg0: i32, %arg1: i32) -> (i32, i32) {
    %c0_i32 = arith.constant 0 : i32
    %c0_i32_0 = arith.constant 0 : i32
    %c0_i32_1 = arith.constant 0 : i32
    return %c0_i32, %c0_i32_0 : i32, i32
  }
  func.func @transform_8(%arg0: i32, %arg1: i32) -> (i32, i32, i32) {
    %c0_i32 = arith.constant 0 : i32
    %c0_i32_0 = arith.constant 0 : i32
    return %arg0, %arg1, %c0_i32 : i32, i32, i32
  }
}

</mosaic_0001>

<llo_original>
// kernel: tpu_custom_call.1
$region0: #{tpu_custom_call.1}
  #allocation0 [shape = 'u32[]', space=smem, size = 0x4, offset = 0x4, fixed_abs, tag = 'smem constant byte address 0x4 - core index']
  #allocation1 [shape = 'u32[72,128]{1,0:T(1,128)}', space=vmem, size = 0x9000, scoped, tag = 'internal scratch']
  %s0 = inlined_call_operand.vmem [shape: f32[2,8,3], index: 0, kind: input, shape index: {}]
  %s1 = inlined_call_operand.vmem [shape: f32[2,3,128], index: 1, kind: input, shape index: {}]
  %s2 = inlined_call_operand.vmem [shape: f32[2,3,128], index: 2, kind: input, shape index: {}]
  %s3 = inlined_call_operand.vmem [shape: f32[3,128], index: 3, kind: input, shape index: {}]
  %s4 = inlined_call_operand.hbm [shape: bf16[128,128], index: 4, kind: input, shape index: {}]
  %s5 = inlined_call_operand.hbm [shape: bf16[128,128], index: 5, kind: input, shape index: {}]
  %s6 = inlined_call_operand.hbm [shape: bf16[128,128], index: 6, kind: input, shape index: {}]
  %s7 = inlined_call_operand.vmem [shape: f32[1,128], index: 7, kind: input, shape index: {}]
  %s8 = inlined_call_operand.hbm [shape: f32[2,8,128], index: 8, kind: output, shape index: {}]
  %s9 = sld [smem:[#allocation0]]
  $region77: #{tpu_custom_call.1} parent=0
    _
  %s11 = ssub.s32 1, %s9
  %s12 = scalar_select 0, %s11, %s9
  $region1: #{tpu_custom_call.1} parent=0
    #allocation2 [shape = 'u8[32768]{0}', space=vmem, size = 0x8000, scoped, tag = 'input window, operand 4, single buffered']
    #allocation3 [shape = 's32[2]{0}', space=sflag, size = 0x8, scoped, tag = 'scoped memory for tpu_custom_call.1']
    #allocation4 [shape = 's32[2]{0}', space=sflag, size = 0x8, scoped, tag = 'scoped memory for tpu_custom_call.1']
    #allocation5 [shape = 'u8[32768]{0}', space=vmem, size = 0x8000, scoped, tag = 'input window, operand 5, single buffered']
    #allocation6 [shape = 's32[1]{0}', space=sflag, size = 0x4, scoped, tag = 'scoped memory for tpu_custom_call.1']
    #allocation7 [shape = 'u8[32768]{0}', space=vmem, size = 0x8000, scoped, tag = 'input window, operand 6, single buffered']
    #allocation8 [shape = 'u8[8192]{0}', space=vmem, size = 0x2000, scoped, tag = 'output window, operand 0']
    %13 = vsyncpa [#allocation3], 0
    %14 = vsyncpa [#allocation6], 0
    %15 = vsyncpa [#allocation4], 0
    %s16 = scalar_lea.sflag [#allocation4], 1
    %17 = vsyncpa %s16, 0
    loop: start=0, step=1, limit=4
    $region2: #{tpu_custom_call.1} parent=1 // loop_pre_header
      _
    $region3: #{tpu_custom_call.1} parent=1 // loop_header
      %s19 = sphi 0, %s23
      %p20 = scmp.ge.s32.totalorder %s19, 4
      %s26 = sphi 0, %s38
      %s27 = sphi 0, %s34
      %s28 = sphi 0, %s26
      %s29 = sphi 0, %s27
      %s30 = sphi 0, %s28
      %s31 = sphi 0, %s29
      %s43 = sphi 0, %s45
      %s46 = sphi 0, %s43
      %s47 = sphi 0, %s46
      %s63 = sphi 0, %s47
      %s69 = sphi 0, %s71
      %s72 = sphi 0, %s69
      %s73 = sphi 0, %s72
      %s89 = sphi 0, %s73
      %s95 = sphi 0, %s97
      %s98 = sphi 0, %s95
      %s99 = sphi 0, %s98
      %s115 = sphi 0, %s99
      %s119 = sphi 0, %s119
      %s121 = sphi 0, %s119
      %s122 = sphi 0, %s121
      %s136 = sphi 0, %s122
      %s140 = sphi 0, %s140
      %s142 = sphi 0, %s140
      %s143 = sphi 0, %s142
      %s157 = sphi 0, %s143
      %s161 = sphi 0, %s161
      %s163 = sphi 0, %s161
      %s164 = sphi 0, %s163
      %s178 = sphi 0, %s164
      %s182 = sphi 0, %s182
      %s184 = sphi 0, %s182
      %s185 = sphi 0, %s184
      %s199 = sphi 0, %s185
      %s203 = sphi 0, %s203
      %s205 = sphi 0, %s203
      %s206 = sphi 0, %s205
      %s220 = sphi 0, %s206
      %s228 = sphi 0, %s230
      %s231 = sphi 0, %s228
      %s232 = sphi 0, %s231
      %s248 = sphi 0, %s232
    $region4: #{tpu_custom_call.1} parent=1 // loop_header_branch
      %22 = sbr.rel (%p20) target = $region8
    $region5: #{tpu_custom_call.1} parent=1 // loop_body
      %s24 = ssub.s32 %s19, 1
      %s25 = ssub.s32 %s19, 2
      %s32 = sadd.s32 1, %s27
      %p33 = scmp.ge.s32.totalorder %s32, 1
      %s34 = scalar_select %p33, 0, %s32
      %s35 = sadd.s32 1, %s26
      %s36 = scalar_select %p33, %s35, %s26
      %p37 = scmp.ge.s32.totalorder %s36, 2
      %s38 = scalar_select %p37, 0, %s36
      %s39 = ssub.s32 %s26, %s38
      %s40 = ssub.s32 %s27, %s34
      %s41 = sor.u32 %s39, %s40
      %p42 = scmp.eq.s32.totalorder %s41, 0
      %s44 = sadd.s32 %s43, 1
      %s45 = scalar_select %p42, %s43, %s44
      %p48 = pneg %p42
      %p49 = scmp.eq.s32.totalorder %s19, 1
      %p50 = por %p48, %p49
      %p51 = scmp.ne.s32.totalorder %s43, %s46
      %p52 = scmp.eq.s32.totalorder %s19, 0
      %p53 = por %p51, %p52
      %p54 = scmp.ne.s32.totalorder %s43, %s46
      %p55 = scmp.eq.s32.totalorder %s24, 1
      %p56 = por %p54, %p55
      %p57 = scmp.ne.s32.totalorder %s46, %s47
      %p58 = scmp.eq.s32.totalorder %s24, 0
      %p59 = por %p57, %p58
      %p60 = scmp.ne.s32.totalorder %s46, %s47
      %p61 = scmp.eq.s32.totalorder %s25, 1
      %p62 = por %p60, %p61
      %p64 = scmp.ne.s32.totalorder %s47, %s63
      %p65 = scmp.eq.s32.totalorder %s25, 0
      %p66 = por %p64, %p65
      %s67 = ssub.s32 %s26, %s38
      %p68 = scmp.eq.s32.totalorder %s67, 0
      %s70 = sadd.s32 %s69, 1
      %s71 = scalar_select %p68, %s69, %s70
      %p74 = pneg %p68
      %p75 = scmp.eq.s32.totalorder %s19, 1
      %p76 = por %p74, %p75
      %p77 = scmp.ne.s32.totalorder %s69, %s72
      %p78 = scmp.eq.s32.totalorder %s19, 0
      %p79 = por %p77, %p78
      %p80 = scmp.ne.s32.totalorder %s69, %s72
      %p81 = scmp.eq.s32.totalorder %s24, 1
      %p82 = por %p80, %p81
      %p83 = scmp.ne.s32.totalorder %s72, %s73
      %p84 = scmp.eq.s32.totalorder %s24, 0
      %p85 = por %p83, %p84
      %p86 = scmp.ne.s32.totalorder %s72, %s73
      %p87 = scmp.eq.s32.totalorder %s25, 1
      %p88 = por %p86, %p87
      %p90 = scmp.ne.s32.totalorder %s73, %s89
      %p91 = scmp.eq.s32.totalorder %s25, 0
      %p92 = por %p90, %p91
      %s93 = ssub.s32 %s26, %s38
      %p94 = scmp.eq.s32.totalorder %s93, 0
      %s96 = sadd.s32 %s95, 1
      %s97 = scalar_select %p94, %s95, %s96
      %p100 = pneg %p94
      %p101 = scmp.eq.s32.totalorder %s19, 1
      %p102 = por %p100, %p101
      %p103 = scmp.ne.s32.totalorder %s95, %s98
      %p104 = scmp.eq.s32.totalorder %s19, 0
      %p105 = por %p103, %p104
      %p106 = scmp.ne.s32.totalorder %s95, %s98
      %p107 = scmp.eq.s32.totalorder %s24, 1
      %p108 = por %p106, %p107
      %p109 = scmp.ne.s32.totalorder %s98, %s99
      %p110 = scmp.eq.s32.totalorder %s24, 0
      %p111 = por %p109, %p110
      %p112 = scmp.ne.s32.totalorder %s98, %s99
      %p113 = scmp.eq.s32.totalorder %s25, 1
      %p114 = por %p112, %p113
      %p116 = scmp.ne.s32.totalorder %s99, %s115
      %p117 = scmp.eq.s32.totalorder %s25, 0
      %p118 = por %p116, %p117
      %s120 = sadd.s32 %s119, 1
      %p123 = scmp.eq.s32.totalorder %s19, 1
      %p124 = scmp.ne.s32.totalorder %s119, %s121
      %p125 = scmp.eq.s32.totalorder %s19, 0
      %p126 = por %p124, %p125
      %p127 = scmp.ne.s32.totalorder %s119, %s121
      %p128 = scmp.eq.s32.totalorder %s24, 1
      %p129 = por %p127, %p128
      %p130 = scmp.ne.s32.totalorder %s121, %s122
      %p131 = scmp.eq.s32.totalorder %s24, 0
      %p132 = por %p130, %p131
      %p133 = scmp.ne.s32.totalorder %s121, %s122
      %p134 = scmp.eq.s32.totalorder %s25, 1
      %p135 = por %p133, %p134
      %p137 = scmp.ne.s32.totalorder %s122, %s136
      %p138 = scmp.eq.s32.totalorder %s25, 0
      %p139 = por %p137, %p138
      %s141 = sadd.s32 %s140, 1
      %p144 = scmp.eq.s32.totalorder %s19, 1
      %p145 = scmp.ne.s32.totalorder %s140, %s142
      %p146 = scmp.eq.s32.totalorder %s19, 0
      %p147 = por %p145, %p146
      %p148 = scmp.ne.s32.totalorder %s140, %s142
      %p149 = scmp.eq.s32.totalorder %s24, 1
      %p150 = por %p148, %p149
      %p151 = scmp.ne.s32.totalorder %s142, %s143
      %p152 = scmp.eq.s32.totalorder %s24, 0
      %p153 = por %p151, %p152
      %p154 = scmp.ne.s32.totalorder %s142, %s143
      %p155 = scmp.eq.s32.totalorder %s25, 1
      %p156 = por %p154, %p155
      %p158 = scmp.ne.s32.totalorder %s143, %s157
      %p159 = scmp.eq.s32.totalorder %s25, 0
      %p160 = por %p158, %p159
      %s162 = sadd.s32 %s161, 1
      %p165 = scmp.eq.s32.totalorder %s19, 1
      %p166 = scmp.ne.s32.totalorder %s161, %s163
      %p167 = scmp.eq.s32.totalorder %s19, 0
      %p168 = por %p166, %p167
      %p169 = scmp.ne.s32.totalorder %s161, %s163
      %p170 = scmp.eq.s32.totalorder %s24, 1
      %p171 = por %p169, %p170
      %p172 = scmp.ne.s32.totalorder %s163, %s164
      %p173 = scmp.eq.s32.totalorder %s24, 0
      %p174 = por %p172, %p173
      %p175 = scmp.ne.s32.totalorder %s163, %s164
      %p176 = scmp.eq.s32.totalorder %s25, 1
      %p177 = por %p175, %p176
      %p179 = scmp.ne.s32.totalorder %s164, %s178
      %p180 = scmp.eq.s32.totalorder %s25, 0
      %p181 = por %p179, %p180
      %s183 = sadd.s32 %s182, 1
      %p186 = scmp.eq.s32.totalorder %s19, 1
      %p187 = scmp.ne.s32.totalorder %s182, %s184
      %p188 = scmp.eq.s32.totalorder %s19, 0
      %p189 = por %p187, %p188
      %p190 = scmp.ne.s32.totalorder %s182, %s184
      %p191 = scmp.eq.s32.totalorder %s24, 1
      %p192 = por %p190, %p191
      %p193 = scmp.ne.s32.totalorder %s184, %s185
      %p194 = scmp.eq.s32.totalorder %s24, 0
      %p195 = por %p193, %p194
      %p196 = scmp.ne.s32.totalorder %s184, %s185
      %p197 = scmp.eq.s32.totalorder %s25, 1
      %p198 = por %p196, %p197
      %p200 = scmp.ne.s32.totalorder %s185, %s199
      %p201 = scmp.eq.s32.totalorder %s25, 0
      %p202 = por %p200, %p201
      %s204 = sadd.s32 %s203, 1
      %p207 = scmp.eq.s32.totalorder %s19, 1
      %p208 = scmp.ne.s32.totalorder %s203, %s205
      %p209 = scmp.eq.s32.totalorder %s19, 0
      %p210 = por %p208, %p209
      %p211 = scmp.ne.s32.totalorder %s203, %s205
      %p212 = scmp.eq.s32.totalorder %s24, 1
      %p213 = por %p211, %p212
      %p214 = scmp.ne.s32.totalorder %s205, %s206
      %p215 = scmp.eq.s32.totalorder %s24, 0
      %p216 = por %p214, %p215
      %p217 = scmp.ne.s32.totalorder %s205, %s206
      %p218 = scmp.eq.s32.totalorder %s25, 1
      %p219 = por %p217, %p218
      %p221 = scmp.ne.s32.totalorder %s206, %s220
      %p222 = scmp.eq.s32.totalorder %s25, 0
      %p223 = por %p221, %p222
      %s224 = ssub.s32 %s26, %s38
      %s225 = ssub.s32 %s27, %s34
      %s226 = sor.u32 %s224, %s225
      %p227 = scmp.eq.s32.totalorder %s226, 0
      %s229 = sadd.s32 %s228, 1
      %s230 = scalar_select %p227, %s228, %s229
      %p233 = pneg %p227
      %p234 = scmp.eq.s32.totalorder %s19, 1
      %p235 = por %p233, %p234
      %p236 = scmp.ne.s32.totalorder %s228, %s231
      %p237 = scmp.eq.s32.totalorder %s19, 0
      %p238 = por %p236, %p237
      %p239 = scmp.ne.s32.totalorder %s228, %s231
      %p240 = scmp.eq.s32.totalorder %s24, 1
      %p241 = por %p239, %p240
      %p242 = scmp.ne.s32.totalorder %s231, %s232
      %p243 = scmp.eq.s32.totalorder %s24, 0
      %p244 = por %p242, %p243
      %p245 = scmp.ne.s32.totalorder %s231, %s232
      %p246 = scmp.eq.s32.totalorder %s25, 1
      %p247 = por %p245, %p246
      %p249 = scmp.ne.s32.totalorder %s232, %s248
      %p250 = scmp.eq.s32.totalorder %s25, 0
      %p251 = por %p249, %p250
      %p252 = scmp.le.s32.totalorder 1, %s19
      %p253 = scmp.lt.s32.totalorder %s19, 3
      %p254 = pnand %p252, %p253
      %p255 = pneg %p254
      // Predicated region
      $region9: #{tpu_custom_call.1} parent=5 // pred_check
        _
      $region10: #{tpu_custom_call.1} parent=5 // pred_check_branch
        %257 = sbr.rel (%p254) target = $region12
      $region11: #{tpu_custom_call.1} parent=5 // pred_region
        %s258 = ssub.s32 %s19, 1
        // Predicated region
        $region13: #{tpu_custom_call.1} parent=11 // pred_check
          %p259 = pneg %p132
        $region14: #{tpu_custom_call.1} parent=11 // pred_check_branch
          %261 = sbr.rel (%p259) target = $region16
        $region15: #{tpu_custom_call.1} parent=11 // pred_region
          _
        $region16: #{tpu_custom_call.1} parent=11 // pred_fallthru
          _
        // Predicated region
        $region17: #{tpu_custom_call.1} parent=11 // pred_check
          %p262 = pneg %p153
        $region18: #{tpu_custom_call.1} parent=11 // pred_check_branch
          %264 = sbr.rel (%p262) target = $region20
        $region19: #{tpu_custom_call.1} parent=11 // pred_region
          %266 = vsyncadd [#allocation3], 0
          %s267 = sshll.u32 %s4, 4
          %s268 = int_to_ptr.hbm [resolvable:$true] %s267
          %s269 = sshll.u32 [#allocation2], 4
          %s270 = int_to_ptr.vmem [resolvable:$true] %s269
          %275 = dma.hbm_to_vmem [thread:$0]  %s268, 1024, %s270, [#allocation3], 64, 64, 4
        $region20: #{tpu_custom_call.1} parent=11 // pred_fallthru
          _
        // Predicated region
        $region21: #{tpu_custom_call.1} parent=11 // pred_check
          %p276 = pneg %p174
        $region22: #{tpu_custom_call.1} parent=11 // pred_check_branch
          %278 = sbr.rel (%p276) target = $region24
        $region23: #{tpu_custom_call.1} parent=11 // pred_region
          %280 = vsyncadd [#allocation6], 0
          %s281 = sshll.u32 %s5, 4
          %s282 = int_to_ptr.hbm [resolvable:$true] %s281
          %s283 = sshll.u32 [#allocation5], 4
          %s284 = int_to_ptr.vmem [resolvable:$true] %s283
          %289 = dma.hbm_to_vmem [thread:$0]  %s282, 1024, %s284, [#allocation6], 64, 64, 4
        $region24: #{tpu_custom_call.1} parent=11 // pred_fallthru
          _
        // Predicated region
        $region25: #{tpu_custom_call.1} parent=11 // pred_check
          %p290 = pneg %p195
        $region26: #{tpu_custom_call.1} parent=11 // pred_check_branch
          %292 = sbr.rel (%p290) target = $region28
        $region27: #{tpu_custom_call.1} parent=11 // pred_region
          %294 = vsyncadd [#allocation6], 0
          %s295 = sshll.u32 %s6, 4
          %s296 = int_to_ptr.hbm [resolvable:$true] %s295
          %s297 = sshll.u32 [#allocation7], 4
          %s298 = int_to_ptr.vmem [resolvable:$true] %s297
          %303 = dma.hbm_to_vmem [thread:$0]  %s296, 1024, %s298, [#allocation6], 64, 64, 4
        $region28: #{tpu_custom_call.1} parent=11 // pred_fallthru
          _
        // Predicated region
        $region29: #{tpu_custom_call.1} parent=11 // pred_check
          %p304 = pneg %p216
        $region30: #{tpu_custom_call.1} parent=11 // pred_check_branch
          %306 = sbr.rel (%p304) target = $region32
        $region31: #{tpu_custom_call.1} parent=11 // pred_region
          _
        $region32: #{tpu_custom_call.1} parent=11 // pred_fallthru
          _
      $region12: #{tpu_custom_call.1} parent=5 // pred_fallthru
        _
      %p307 = scmp.lt.s32.totalorder %s19, 2
      // Predicated region
      $region33: #{tpu_custom_call.1} parent=5 // pred_check
        %p308 = pneg %p307
      $region34: #{tpu_custom_call.1} parent=5 // pred_check_branch
        %310 = sbr.rel (%p308) target = $region36
      $region35: #{tpu_custom_call.1} parent=5 // pred_region
        // Predicated region
        $region37: #{tpu_custom_call.1} parent=35 // pred_check
          %p311 = pneg %p53
        $region38: #{tpu_custom_call.1} parent=35 // pred_check_branch
          %313 = sbr.rel (%p311) target = $region40
        $region39: #{tpu_custom_call.1} parent=35 // pred_region
          %p314 = scmp.lt.s32.totalorder %s26, 1
          %s315 = scalar_select %p314, %s26, 1
          %p316 = scmp.lt.s32.totalorder %s27, 0
          %s317 = scalar_select %p316, %s27, 0
          %s318 = sadd.s32 %s317, %s315
          %s319 = smul.addr %s318, 8
          %s320 = scalar_lea.vmem %s0, %s319
        $region40: #{tpu_custom_call.1} parent=35 // pred_fallthru
          _
        // Predicated region
        $region41: #{tpu_custom_call.1} parent=35 // pred_check
          %p321 = pneg %p79
        $region42: #{tpu_custom_call.1} parent=35 // pred_check_branch
          %323 = sbr.rel (%p321) target = $region44
        $region43: #{tpu_custom_call.1} parent=35 // pred_region
          %p324 = scmp.lt.s32.totalorder %s26, 1
          %s325 = scalar_select %p324, %s26, 1
          %s326 = smul.addr %s325, 4
          %s327 = scalar_lea.vmem %s1, %s326
        $region44: #{tpu_custom_call.1} parent=35 // pred_fallthru
          _
        // Predicated region
        $region45: #{tpu_custom_call.1} parent=35 // pred_check
          %p328 = pneg %p105
        $region46: #{tpu_custom_call.1} parent=35 // pred_check_branch
          %330 = sbr.rel (%p328) target = $region48
        $region47: #{tpu_custom_call.1} parent=35 // pred_region
          %p331 = scmp.lt.s32.totalorder %s26, 1
          %s332 = scalar_select %p331, %s26, 1
          %s333 = smul.addr %s332, 4
          %s334 = scalar_lea.vmem %s2, %s333
        $region48: #{tpu_custom_call.1} parent=35 // pred_fallthru
          _
      $region36: #{tpu_custom_call.1} parent=5 // pred_fallthru
        _
      %p335 = scmp.le.s32.totalorder 1, %s19
      %p336 = scmp.lt.s32.totalorder %s19, 3
      %p337 = pnand %p335, %p336
      %p338 = pneg %p337
      // Predicated region
      $region49: #{tpu_custom_call.1} parent=5 // pred_check
        _
      $region50: #{tpu_custom_call.1} parent=5 // pred_check_branch
        %340 = sbr.rel (%p337) target = $region52
      $region51: #{tpu_custom_call.1} parent=5 // pred_region
        %s341 = ssub.s32 %s19, 1
        // Predicated region
        $region53: #{tpu_custom_call.1} parent=51 // pred_check
          %p342 = pneg %p153
        $region54: #{tpu_custom_call.1} parent=51 // pred_check_branch
          %344 = sbr.rel (%p342) target = $region56
        $region55: #{tpu_custom_call.1} parent=51 // pred_region
          %346 = dma.done [#allocation3], 1024
        $region56: #{tpu_custom_call.1} parent=51 // pred_fallthru
          _
        // Predicated region
        $region57: #{tpu_custom_call.1} parent=51 // pred_check
          %p347 = pneg %p174
        $region58: #{tpu_custom_call.1} parent=51 // pred_check_branch
          %349 = sbr.rel (%p347) target = $region60
        $region59: #{tpu_custom_call.1} parent=51 // pred_region
          %351 = dma.done [#allocation6], 1024
        $region60: #{tpu_custom_call.1} parent=51 // pred_fallthru
          _
        // Predicated region
        $region61: #{tpu_custom_call.1} parent=51 // pred_check
          %p352 = pneg %p195
        $region62: #{tpu_custom_call.1} parent=51 // pred_check_branch
          %354 = sbr.rel (%p352) target = $region64
        $region63: #{tpu_custom_call.1} parent=51 // pred_region
          %356 = dma.done [#allocation6], 1024
        $region64: #{tpu_custom_call.1} parent=51 // pred_fallthru
          _
        %p357 = scmp.lt.s32.totalorder %s28, 1
        %s358 = scalar_select %p357, %s28, 1
        %p359 = scmp.lt.s32.totalorder %s29, 0
        %s360 = scalar_select %p359, %s29, 0
        %s361 = sadd.s32 %s360, %s358
        %s362 = smul.addr %s361, 8
        %s363 = scalar_lea.vmem %s0, %s362
        %p364 = pneg %p59
        %p365 = pneg %p56
        %p366 = scmp.lt.s32.totalorder %s28, 1
        %s367 = scalar_select %p366, %s28, 1
        %s368 = smul.addr %s367, 4
        %s369 = scalar_lea.vmem %s1, %s368
        %p370 = pneg %p85
        %p371 = pneg %p82
        %p372 = scmp.lt.s32.totalorder %s28, 1
        %s373 = scalar_select %p372, %s28, 1
        %s374 = smul.addr %s373, 4
        %s375 = scalar_lea.vmem %s2, %s374
        %p376 = pneg %p111
        %p377 = pneg %p108
        %p378 = pneg %p132
        %p379 = pneg %p129
        %p380 = pneg %p153
        %p381 = pneg %p150
        %p382 = pneg %p174
        %p383 = pneg %p171
        %p384 = pneg %p195
        %p385 = pneg %p192
        %p386 = pneg %p216
        %p387 = pneg %p213
        %p388 = pneg %p244
        %p389 = pneg %p241
        %s390 = sand.u32 %s231, 1
        %s391 = scalar_lea.sflag [#allocation4], %s390
        %s392 = sand.u32 %s231, 1
        %s393 = smul.addr %s392, 8
        %s394 = scalar_lea.vmem [#allocation8], %s393
        %p395 = scmp.lt.s32.totalorder %s28, 1
        %s396 = scalar_select %p395, %s28, 1
        %p397 = scmp.lt.s32.totalorder %s29, 0
        %s398 = scalar_select %p397, %s29, 0
        %s399 = sadd.s32 %s398, %s396
        %s400 = smul.addr %s399, 8
        %s401 = scalar_lea.vmem %s0, %s400
        %p402 = scmp.lt.s32.totalorder %s28, 1
        %s403 = scalar_select %p402, %s28, 1
        %s404 = smul.addr %s403, 4
        %s405 = scalar_lea.vmem %s1, %s404
        %p406 = scmp.lt.s32.totalorder %s28, 1
        %s407 = scalar_select %p406, %s28, 1
        %s408 = smul.addr %s407, 4
        %s409 = scalar_lea.vmem %s2, %s408
        %v410 = vld [vmem:[%s405] sm:$0x7]
        %v411 = vld [vmem:[%s409] sm:$0x7]
        %v412 = vld [vmem:[%s401] sm:$0xff]
        %v413 = vld [vmem:[%s3] sm:$0x7]
        %415 = vset.pattern.permute.xlu0 0
        %416 = vperm.xlu0 %415, %v412
        %v417 = vpop.permute.xlu0 %416
        %v419 = vperm.slane %v413, 0
        %v420 = vmul.f32 %v417, %v419
        %421 = vset.pattern.permute.xlu0 1
        %422 = vperm.xlu0 %421, %v412
        %v423 = vpop.permute.xlu0 %422
        %v425 = vperm.slane %v413, 1
        %v426 = vmul.f32 %v423, %v425
        %v427 = vadd.f32 %v420, %v426
        %428 = vset.pattern.permute.xlu0 2
        %429 = vperm.xlu0 %428, %v412
        %v430 = vpop.permute.xlu0 %429
        %v432 = vperm.slane %v413, 2
        %v433 = vmul.f32 %v430, %v432
        %v434 = vadd.f32 %v427, %v433
        %v435 = vperm.slane %v410, 0
        %v436 = vmul.f32 %v434, %v435
        %v437 = vperm.slane %v411, 0
        %v438 = vadd.f32 %v436, %v437
        %v439 = vadd.f32 %v438, 0.5
        %v440 = vfloor.f32 %v439
        %v441 = vsub.f32 %v438, %v440
        %vm442 = vcmp.gt.f32.partialorder %v441, 0.25
        %v443 = vsub.f32 0.5, %v441
        %v444 = vsel %vm442, %v443, %v441
        %vm445 = vcmp.lt.f32.partialorder %v444, -0.25
        %v446 = vsub.f32 -0.5, %v444
        %v447 = vsel %vm445, %v446, %v444
        %v448 = vpack.c.bf16 %v447, %v447
        %v449 = vunpack.c.l.bf16 %v448
        %v450 = vmul.f32 %v449, 6.28125
        %v451 = vpack.c.bf16 %v450, %v450
        %v452 = vunpack.c.l.bf16 %v451
        %v453 = vmul.f32 %v452, %v452
        %v454 = vpack.c.bf16 %v453, %v453
        %v455 = vunpack.c.l.bf16 %v454
        %v456 = vmul.f32 %v455, -0.00019550323
        %v457 = vpack.c.bf16 %v456, %v456
        %v458 = vunpack.c.l.bf16 %v457
        %v459 = vadd.f32 %v458, 0.008361816
        %v460 = vpack.c.bf16 %v459, %v459
        %v461 = vunpack.c.l.bf16 %v460
        %v462 = vmul.f32 %v455, %v461
        %v463 = vpack.c.bf16 %v462, %v462
        %v464 = vunpack.c.l.bf16 %v463
        %v465 = vadd.f32 %v464, -0.16699219
        %v466 = vpack.c.bf16 %v465, %v465
        %v467 = vunpack.c.l.bf16 %v466
        %v468 = vmul.f32 %v455, %v467
        %v469 = vpack.c.bf16 %v468, %v468
        %v470 = vunpack.c.l.bf16 %v469
        %v471 = vmul.f32 %v452, %v470
        %v472 = vpack.c.bf16 %v471, %v471
        %v473 = vunpack.c.l.bf16 %v472
        %v474 = vadd.f32 %v452, %v473
        %v475 = vpack.c.bf16 %v474, %v474
        %v476 = vld [vmem:[#allocation2] sm:$0xf]
        %v477 = vld [vmem:[#allocation2 + $0x4] sm:$0xf]
        %v478 = vld [vmem:[#allocation2 + $0x8] sm:$0xf]
        %v479 = vld [vmem:[#allocation2 + $0xc] sm:$0xf]
        %v480 = vld [vmem:[#allocation2 + $0x10] sm:$0xf]
        %v481 = vld [vmem:[#allocation2 + $0x14] sm:$0xf]
        %v482 = vld [vmem:[#allocation2 + $0x18] sm:$0xf]
        %v483 = vld [vmem:[#allocation2 + $0x1c] sm:$0xf]
        %v484 = vld [vmem:[#allocation2 + $0x20] sm:$0xf]
        %v485 = vld [vmem:[#allocation2 + $0x24] sm:$0xf]
        %v486 = vld [vmem:[#allocation2 + $0x28] sm:$0xf]
        %v487 = vld [vmem:[#allocation2 + $0x2c] sm:$0xf]
        %v488 = vld [vmem:[#allocation2 + $0x30] sm:$0xf]
        %v489 = vld [vmem:[#allocation2 + $0x34] sm:$0xf]
        %v490 = vld [vmem:[#allocation2 + $0x38] sm:$0xf]
        %v491 = vld [vmem:[#allocation2 + $0x3c] sm:$0xf]
        %v508 = vunpack.c.l.b16 %v476
        %v509 = vunpack.c.l.b16 %v477
        %v510 = vunpack.c.l.b16 %v478
        %v511 = vunpack.c.l.b16 %v479
        %v512 = vunpack.c.l.b16 %v480
        %v513 = vunpack.c.l.b16 %v481
        %v514 = vunpack.c.l.b16 %v482
        %v515 = vunpack.c.l.b16 %v483
        %v516 = vunpack.c.l.b16 %v484
        %v517 = vunpack.c.l.b16 %v485
        %v518 = vunpack.c.l.b16 %v486
        %v519 = vunpack.c.l.b16 %v487
        %v520 = vunpack.c.l.b16 %v488
        %v521 = vunpack.c.l.b16 %v489
        %v522 = vunpack.c.l.b16 %v490
        %v523 = vunpack.c.l.b16 %v491
        %v524 = vpack.c.b16 %v509, %v508
        %v525 = vpack.c.b16 %v511, %v510
        %v526 = vpack.c.b16 %v513, %v512
        %v527 = vpack.c.b16 %v515, %v514
        %v528 = vpack.c.b16 %v517, %v516
        %v529 = vpack.c.b16 %v519, %v518
        %v530 = vpack.c.b16 %v521, %v520
        %v531 = vpack.c.b16 %v523, %v522
        %540 = vmatpush.bf16.msra.mxu0 %v531
        %541 = vmatpush.bf16.msra.mxu0 %v530
        %542 = vmatpush.bf16.msra.mxu0 %v529
        %543 = vmatpush.bf16.msra.mxu0 %v528
        %544 = vmatpush.bf16.msra.mxu0 %v527
        %545 = vmatpush.bf16.msra.mxu0 %v526
        %546 = vmatpush.bf16.msra.mxu0 %v525
        %547 = vmatpush.bf16.msra.mxu0 %v524
        %548 = vmatmul.bf16.gmra.mxu0 %v475
        %v549 = vpop.f32.mrf.mxu0
        %v550 = vadd.f32 0.0, %v549
        %v551 = vpop.f32.mrf.mxu0
        %552 = vdwg.mxu0
        %v553 = vperm.slane %v410, 1
        %v554 = vmul.f32 %v550, %v553
        %v555 = vperm.slane %v411, 1
        %v556 = vadd.f32 %v554, %v555
        %v557 = vadd.f32 %v556, 0.5
        %v558 = vfloor.f32 %v557
        %v559 = vsub.f32 %v556, %v558
        %vm560 = vcmp.gt.f32.partialorder %v559, 0.25
        %v561 = vsub.f32 0.5, %v559
        %v562 = vsel %vm560, %v561, %v559
        %vm563 = vcmp.lt.f32.partialorder %v562, -0.25
        %v564 = vsub.f32 -0.5, %v562
        %v565 = vsel %vm563, %v564, %v562
        %v566 = vpack.c.bf16 %v565, %v565
        %v567 = vunpack.c.l.bf16 %v566
        %v568 = vmul.f32 %v567, 6.28125
        %v569 = vpack.c.bf16 %v568, %v568
        %v570 = vunpack.c.l.bf16 %v569
        %v571 = vmul.f32 %v570, %v570
        %v572 = vpack.c.bf16 %v571, %v571
        %v573 = vunpack.c.l.bf16 %v572
        %v574 = vmul.f32 %v573, -0.00019550323
        %v575 = vpack.c.bf16 %v574, %v574
        %v576 = vunpack.c.l.bf16 %v575
        %v577 = vadd.f32 %v576, 0.008361816
        %v578 = vpack.c.bf16 %v577, %v577
        %v579 = vunpack.c.l.bf16 %v578
        %v580 = vmul.f32 %v573, %v579
        %v581 = vpack.c.bf16 %v580, %v580
        %v582 = vunpack.c.l.bf16 %v581
        %v583 = vadd.f32 %v582, -0.16699219
        %v584 = vpack.c.bf16 %v583, %v583
        %v585 = vunpack.c.l.bf16 %v584
        %v586 = vmul.f32 %v573, %v585
        %v587 = vpack.c.bf16 %v586, %v586
        %v588 = vunpack.c.l.bf16 %v587
        %v589 = vmul.f32 %v570, %v588
        %v590 = vpack.c.bf16 %v589, %v589
        %v591 = vunpack.c.l.bf16 %v590
        %v592 = vadd.f32 %v570, %v591
        %v593 = vpack.c.bf16 %v592, %v592
        %v594 = vld [vmem:[#allocation5] sm:$0xf]
        %v595 = vld [vmem:[#allocation5 + $0x4] sm:$0xf]
        %v596 = vld [vmem:[#allocation5 + $0x8] sm:$0xf]
        %v597 = vld [vmem:[#allocation5 + $0xc] sm:$0xf]
        %v598 = vld [vmem:[#allocation5 + $0x10] sm:$0xf]
        %v599 = vld [vmem:[#allocation5 + $0x14] sm:$0xf]
        %v600 = vld [vmem:[#allocation5 + $0x18] sm:$0xf]
        %v601 = vld [vmem:[#allocation5 + $0x1c] sm:$0xf]
        %v602 = vld [vmem:[#allocation5 + $0x20] sm:$0xf]
        %v603 = vld [vmem:[#allocation5 + $0x24] sm:$0xf]
        %v604 = vld [vmem:[#allocation5 + $0x28] sm:$0xf]
        %v605 = vld [vmem:[#allocation5 + $0x2c] sm:$0xf]
        %v606 = vld [vmem:[#allocation5 + $0x30] sm:$0xf]
        %v607 = vld [vmem:[#allocation5 + $0x34] sm:$0xf]
        %v608 = vld [vmem:[#allocation5 + $0x38] sm:$0xf]
        %v609 = vld [vmem:[#allocation5 + $0x3c] sm:$0xf]
        %v626 = vunpack.c.l.b16 %v594
        %v627 = vunpack.c.l.b16 %v595
        %v628 = vunpack.c.l.b16 %v596
        %v629 = vunpack.c.l.b16 %v597
        %v630 = vunpack.c.l.b16 %v598
        %v631 = vunpack.c.l.b16 %v599
        %v632 = vunpack.c.l.b16 %v600
        %v633 = vunpack.c.l.b16 %v601
        %v634 = vunpack.c.l.b16 %v602
        %v635 = vunpack.c.l.b16 %v603
        %v636 = vunpack.c.l.b16 %v604
        %v637 = vunpack.c.l.b16 %v605
        %v638 = vunpack.c.l.b16 %v606
        %v639 = vunpack.c.l.b16 %v607
        %v640 = vunpack.c.l.b16 %v608
        %v641 = vunpack.c.l.b16 %v609
        %v642 = vpack.c.b16 %v627, %v626
        %v643 = vpack.c.b16 %v629, %v628
        %v644 = vpack.c.b16 %v631, %v630
        %v645 = vpack.c.b16 %v633, %v632
        %v646 = vpack.c.b16 %v635, %v634
        %v647 = vpack.c.b16 %v637, %v636
        %v648 = vpack.c.b16 %v639, %v638
        %v649 = vpack.c.b16 %v641, %v640
        %658 = vmatpush.bf16.msra.mxu0 %v649
        %659 = vmatpush.bf16.msra.mxu0 %v648
        %660 = vmatpush.bf16.msra.mxu0 %v647
        %661 = vmatpush.bf16.msra.mxu0 %v646
        %662 = vmatpush.bf16.msra.mxu0 %v645
        %663 = vmatpush.bf16.msra.mxu0 %v644
        %664 = vmatpush.bf16.msra.mxu0 %v643
        %665 = vmatpush.bf16.msra.mxu0 %v642
        %666 = vmatmul.bf16.gmra.mxu0 %v593
        %v667 = vpop.f32.mrf.mxu0
        %v668 = vadd.f32 0.0, %v667
        %v669 = vpop.f32.mrf.mxu0
        %670 = vdwg.mxu0
        %v671 = vperm.slane %v410, 2
        %v672 = vmul.f32 %v668, %v671
        %v673 = vperm.slane %v411, 2
        %v674 = vadd.f32 %v672, %v673
        %v675 = vadd.f32 %v674, 0.5
        %v676 = vfloor.f32 %v675
        %v677 = vsub.f32 %v674, %v676
        %vm678 = vcmp.gt.f32.partialorder %v677, 0.25
        %v679 = vsub.f32 0.5, %v677
        %v680 = vsel %vm678, %v679, %v677
        %vm681 = vcmp.lt.f32.partialorder %v680, -0.25
        %v682 = vsub.f32 -0.5, %v680
        %v683 = vsel %vm681, %v682, %v680
        %v684 = vpack.c.bf16 %v683, %v683
        %v685 = vunpack.c.l.bf16 %v684
        %v686 = vmul.f32 %v685, 6.28125
        %v687 = vpack.c.bf16 %v686, %v686
        %v688 = vunpack.c.l.bf16 %v687
        %v689 = vmul.f32 %v688, %v688
        %v690 = vpack.c.bf16 %v689, %v689
        %v691 = vunpack.c.l.bf16 %v690
        %v692 = vmul.f32 %v691, -0.00019550323
        %v693 = vpack.c.bf16 %v692, %v692
        %v694 = vunpack.c.l.bf16 %v693
        %v695 = vadd.f32 %v694, 0.008361816
        %v696 = vpack.c.bf16 %v695, %v695
        %v697 = vunpack.c.l.bf16 %v696
        %v698 = vmul.f32 %v691, %v697
        %v699 = vpack.c.bf16 %v698, %v698
        %v700 = vunpack.c.l.bf16 %v699
        %v701 = vadd.f32 %v700, -0.16699219
        %v702 = vpack.c.bf16 %v701, %v701
        %v703 = vunpack.c.l.bf16 %v702
        %v704 = vmul.f32 %v691, %v703
        %v705 = vpack.c.bf16 %v704, %v704
        %v706 = vunpack.c.l.bf16 %v705
        %v707 = vmul.f32 %v688, %v706
        %v708 = vpack.c.bf16 %v707, %v707
        %v709 = vunpack.c.l.bf16 %v708
        %v710 = vadd.f32 %v688, %v709
        %v711 = vpack.c.bf16 %v710, %v710
        %v712 = vld [vmem:[#allocation7] sm:$0xf]
        %v713 = vld [vmem:[#allocation7 + $0x4] sm:$0xf]
        %v714 = vld [vmem:[#allocation7 + $0x8] sm:$0xf]
        %v715 = vld [vmem:[#allocation7 + $0xc] sm:$0xf]
        %v716 = vld [vmem:[#allocation7 + $0x10] sm:$0xf]
        %v717 = vld [vmem:[#allocation7 + $0x14] sm:$0xf]
        %v718 = vld [vmem:[#allocation7 + $0x18] sm:$0xf]
        %v719 = vld [vmem:[#allocation7 + $0x1c] sm:$0xf]
        %v720 = vld [vmem:[#allocation7 + $0x20] sm:$0xf]
        %v721 = vld [vmem:[#allocation7 + $0x24] sm:$0xf]
        %v722 = vld [vmem:[#allocation7 + $0x28] sm:$0xf]
        %v723 = vld [vmem:[#allocation7 + $0x2c] sm:$0xf]
        %v724 = vld [vmem:[#allocation7 + $0x30] sm:$0xf]
        %v725 = vld [vmem:[#allocation7 + $0x34] sm:$0xf]
        %v726 = vld [vmem:[#allocation7 + $0x38] sm:$0xf]
        %v727 = vld [vmem:[#allocation7 + $0x3c] sm:$0xf]
        %v728 = vld [vmem:[%s7] sm:$0x1]
        %v730 = vperm.slane %v728, 0
        %v748 = vunpack.c.l.b16 %v712
        %v749 = vunpack.c.l.b16 %v713
        %v750 = vunpack.c.l.b16 %v714
        %v751 = vunpack.c.l.b16 %v715
        %v752 = vunpack.c.l.b16 %v716
        %v753 = vunpack.c.l.b16 %v717
        %v754 = vunpack.c.l.b16 %v718
        %v755 = vunpack.c.l.b16 %v719
        %v756 = vunpack.c.l.b16 %v720
        %v757 = vunpack.c.l.b16 %v721
        %v758 = vunpack.c.l.b16 %v722
        %v759 = vunpack.c.l.b16 %v723
        %v760 = vunpack.c.l.b16 %v724
        %v761 = vunpack.c.l.b16 %v725
        %v762 = vunpack.c.l.b16 %v726
        %v763 = vunpack.c.l.b16 %v727
        %v764 = vpack.c.b16 %v749, %v748
        %v765 = vpack.c.b16 %v751, %v750
        %v766 = vpack.c.b16 %v753, %v752
        %v767 = vpack.c.b16 %v755, %v754
        %v768 = vpack.c.b16 %v757, %v756
        %v769 = vpack.c.b16 %v759, %v758
        %v770 = vpack.c.b16 %v761, %v760
        %v771 = vpack.c.b16 %v763, %v762
        %780 = vmatpush.bf16.msra.mxu0 %v771
        %781 = vmatpush.bf16.msra.mxu0 %v770
        %782 = vmatpush.bf16.msra.mxu0 %v769
        %783 = vmatpush.bf16.msra.mxu0 %v768
        %784 = vmatpush.bf16.msra.mxu0 %v767
        %785 = vmatpush.bf16.msra.mxu0 %v766
        %786 = vmatpush.bf16.msra.mxu0 %v765
        %787 = vmatpush.bf16.msra.mxu0 %v764
        %788 = vmatmul.bf16.gmra.mxu0 %v711
        %v789 = vpop.f32.mrf.mxu0
        %v790 = vadd.f32 %v730, %v789
        %v791 = vpop.f32.mrf.mxu0
        %792 = vdwg.mxu0
        %793 = vst [vmem:[%s394] sm:$0xff] %v790
        %s794 = sand.u32 %s231, 1
        %s795 = scalar_lea.sflag [#allocation4], %s794
        %s796 = sand.u32 %s231, 1
        %s797 = smul.addr %s796, 8
        %s798 = scalar_lea.vmem [#allocation8], %s797
        // Predicated region
        $region65: #{tpu_custom_call.1} parent=51 // pred_check
          %p799 = pneg %p241
        $region66: #{tpu_custom_call.1} parent=51 // pred_check_branch
          %801 = sbr.rel (%p799) target = $region68
        $region67: #{tpu_custom_call.1} parent=51 // pred_region
          %803 = vsyncadd %s795, 0
          %s804 = sadd.s32 %s29, %s28
          %s805 = smul.addr %s804, 8
          %s806 = scalar_lea.hbm %s8, %s805
          %s808 = sshll.u32 %s798, 4
          %s809 = int_to_ptr.vmem [resolvable:$true] %s808
          %s810 = sshll.u32 %s806, 4
          %s811 = int_to_ptr.hbm [resolvable:$true] %s810
          %813 = dma.vmem_to_hbm [thread:$0]  %s809, 128, %s811, %s795
        $region68: #{tpu_custom_call.1} parent=51 // pred_fallthru
          _
      $region52: #{tpu_custom_call.1} parent=5 // pred_fallthru
        _
      %p814 = scmp.le.s32.totalorder 2, %s19
      // Predicated region
      $region69: #{tpu_custom_call.1} parent=5 // pred_check
        %p815 = pneg %p814
      $region70: #{tpu_custom_call.1} parent=5 // pred_check_branch
        %817 = sbr.rel (%p815) target = $region72
      $region71: #{tpu_custom_call.1} parent=5 // pred_region
        %s818 = ssub.s32 %s19, 2
        // Predicated region
        $region73: #{tpu_custom_call.1} parent=71 // pred_check
          %p819 = pneg %p247
        $region74: #{tpu_custom_call.1} parent=71 // pred_check_branch
          %821 = sbr.rel (%p819) target = $region76
        $region75: #{tpu_custom_call.1} parent=71 // pred_region
          %s822 = sand.u32 %s232, 1
          %s823 = scalar_lea.sflag [#allocation4], %s822
          %s824 = sand.u32 %s232, 1
          %s825 = smul.addr %s824, 8
          %s826 = scalar_lea.vmem [#allocation8], %s825
          %828 = dma.done %s823, 128
        $region76: #{tpu_custom_call.1} parent=71 // pred_fallthru
          _
      $region72: #{tpu_custom_call.1} parent=5 // pred_fallthru
        _
    $region6: #{tpu_custom_call.1} parent=1 // loop_footer
      %s23 = sadd.s32 1, %s19
    $region7: #{tpu_custom_call.1} parent=1 // loop_footer_branch
      %18 = sbr.rel target = $region3
    $region8: #{tpu_custom_call.1} parent=1 // loop_exit
      _
    %829 = vsyncpa [#allocation3], 1
    %s830 = scalar_lea.sflag [#allocation3], 1
    %831 = vsyncpa %s830, 1
    %832 = vsyncpa [#allocation6], 1
    %833 = vsyncpa [#allocation4], 1
    %s834 = scalar_lea.sflag [#allocation4], 1
    %835 = vsyncpa %s834, 1

// kernel: tpu_custom_call.1
$region0: #{tpu_custom_call.1}
  #allocation0 [shape = 'u32[]', space=smem, size = 0x4, offset = 0x4, fixed_abs, tag = 'smem constant byte address 0x4 - core index']
  #allocation1 [shape = 'u32[72,128]{1,0:T(1,128)}', space=vmem, size = 0x9000, scoped, tag = 'internal scratch']
  %s0 = inlined_call_operand.vmem [shape: f32[2,8,3], index: 0, kind: input, shape index: {}]
  %s1 = inlined_call_operand.vmem [shape: f32[2,3,128], index: 1, kind: input, shape index: {}]
  %s2 = inlined_call_operand.vmem [shape: f32[2,3,128], index: 2, kind: input, shape index: {}]
  %s3 = inlined_call_operand.vmem [shape: f32[3,128], index: 3, kind: input, shape index: {}]
  %s4 = inlined_call_operand.hbm [shape: bf16[128,128], index: 4, kind: input, shape index: {}]
  %s5 = inlined_call_operand.hbm [shape: bf16[128,128], index: 5, kind: input, shape index: {}]
  %s6 = inlined_call_operand.hbm [shape: bf16[128,128], index: 6, kind: input, shape index: {}]
  %s7 = inlined_call_operand.vmem [shape: f32[1,128], index: 7, kind: input, shape index: {}]
  %s8 = inlined_call_operand.hbm [shape: f32[2,8,128], index: 8, kind: output, shape index: {}]
  %s9 = sld [smem:[#allocation0]]
  $region77: #{tpu_custom_call.1} parent=0
    _
  %s11 = ssub.s32 1, %s9
  %s12 = scalar_select 0, %s11, %s9
  $region1: #{tpu_custom_call.1} parent=0
    #allocation2 [shape = 'u8[32768]{0}', space=vmem, size = 0x8000, scoped, tag = 'input window, operand 4, single buffered']
    #allocation3 [shape = 's32[2]{0}', space=sflag, size = 0x8, scoped, tag = 'scoped memory for tpu_custom_call.1']
    #allocation4 [shape = 's32[2]{0}', space=sflag, size = 0x8, scoped, tag = 'scoped memory for tpu_custom_call.1']
    #allocation5 [shape = 'u8[32768]{0}', space=vmem, size = 0x8000, scoped, tag = 'input window, operand 5, single buffered']
    #allocation6 [shape = 's32[1]{0}', space=sflag, size = 0x4, scoped, tag = 'scoped memory for tpu_custom_call.1']
    #allocation7 [shape = 'u8[32768]{0}', space=vmem, size = 0x8000, scoped, tag = 'input window, operand 6, single buffered']
    #allocation8 [shape = 'u8[8192]{0}', space=vmem, size = 0x2000, scoped, tag = 'output window, operand 0']
    %13 = vsyncpa [#allocation3], 0
    %14 = vsyncpa [#allocation6], 0
    %15 = vsyncpa [#allocation4], 0
    %s16 = scalar_lea.sflag [#allocation4], 1
    %17 = vsyncpa %s16, 0
    loop: start=0, step=1, limit=4
    $region2: #{tpu_custom_call.1} parent=1 // loop_pre_header
      _
    $region3: #{tpu_custom_call.1} parent=1 // loop_header
      %s19 = sphi 0, %s23
      %p20 = scmp.ge.s32.totalorder %s19, 4
      %s26 = sphi 0, %s38
      %s27 = sphi 0, %s34
      %s28 = sphi 0, %s26
      %s29 = sphi 0, %s27
      %s30 = sphi 0, %s28
      %s31 = sphi 0, %s29
      %s43 = sphi 0, %s45
      %s46 = sphi 0, %s43
      %s47 = sphi 0, %s46
      %s63 = sphi 0, %s47
      %s69 = sphi 0, %s71
      %s72 = sphi 0, %s69
      %s73 = sphi 0, %s72
      %s89 = sphi 0, %s73
      %s95 = sphi 0, %s97
      %s98 = sphi 0, %s95
      %s99 = sphi 0, %s98
      %s115 = sphi 0, %s99
      %s119 = sphi 0, %s119
      %s121 = sphi 0, %s119
      %s122 = sphi 0, %s121
      %s136 = sphi 0, %s122
      %s140 = sphi 0, %s140
      %s142 = sphi 0, %s140
      %s143 = sphi 0, %s142
      %s157 = sphi 0, %s143
      %s161 = sphi 0, %s161
      %s163 = sphi 0, %s161
      %s164 = sphi 0, %s163
      %s178 = sphi 0, %s164
      %s182 = sphi 0, %s182
      %s184 = sphi 0, %s182
      %s185 = sphi 0, %s184
      %s199 = sphi 0, %s185
      %s203 = sphi 0, %s203
      %s205 = sphi 0, %s203
      %s206 = sphi 0, %s205
      %s220 = sphi 0, %s206
      %s228 = sphi 0, %s230
      %s231 = sphi 0, %s228
      %s232 = sphi 0, %s231
      %s248 = sphi 0, %s232
    $region4: #{tpu_custom_call.1} parent=1 // loop_header_branch
      %22 = sbr.rel (%p20) target = $region8
    $region5: #{tpu_custom_call.1} parent=1 // loop_body
      %s24 = ssub.s32 %s19, 1
      %s25 = ssub.s32 %s19, 2
      %s32 = sadd.s32 1, %s27
      %p33 = scmp.ge.s32.totalorder %s32, 1
      %s34 = scalar_select %p33, 0, %s32
      %s35 = sadd.s32 1, %s26
      %s36 = scalar_select %p33, %s35, %s26
      %p37 = scmp.ge.s32.totalorder %s36, 2
      %s38 = scalar_select %p37, 0, %s36
      %s39 = ssub.s32 %s26, %s38
      %s40 = ssub.s32 %s27, %s34
      %s41 = sor.u32 %s39, %s40
      %p42 = scmp.eq.s32.totalorder %s41, 0
      %s44 = sadd.s32 %s43, 1
      %s45 = scalar_select %p42, %s43, %s44
      %p48 = pneg %p42
      %p49 = scmp.eq.s32.totalorder %s19, 1
      %p50 = por %p48, %p49
      %p51 = scmp.ne.s32.totalorder %s43, %s46
      %p52 = scmp.eq.s32.totalorder %s19, 0
      %p53 = por %p51, %p52
      %p54 = scmp.ne.s32.totalorder %s43, %s46
      %p55 = scmp.eq.s32.totalorder %s24, 1
      %p56 = por %p54, %p55
      %p57 = scmp.ne.s32.totalorder %s46, %s47
      %p58 = scmp.eq.s32.totalorder %s24, 0
      %p59 = por %p57, %p58
      %p60 = scmp.ne.s32.totalorder %s46, %s47
      %p61 = scmp.eq.s32.totalorder %s25, 1
      %p62 = por %p60, %p61
      %p64 = scmp.ne.s32.totalorder %s47, %s63
      %p65 = scmp.eq.s32.totalorder %s25, 0
      %p66 = por %p64, %p65
      %s67 = ssub.s32 %s26, %s38
      %p68 = scmp.eq.s32.totalorder %s67, 0
      %s70 = sadd.s32 %s69, 1
      %s71 = scalar_select %p68, %s69, %s70
      %p74 = pneg %p68
      %p75 = scmp.eq.s32.totalorder %s19, 1
      %p76 = por %p74, %p75
      %p77 = scmp.ne.s32.totalorder %s69, %s72
      %p78 = scmp.eq.s32.totalorder %s19, 0
      %p79 = por %p77, %p78
      %p80 = scmp.ne.s32.totalorder %s69, %s72
      %p81 = scmp.eq.s32.totalorder %s24, 1
      %p82 = por %p80, %p81
      %p83 = scmp.ne.s32.totalorder %s72, %s73
      %p84 = scmp.eq.s32.totalorder %s24, 0
      %p85 = por %p83, %p84
      %p86 = scmp.ne.s32.totalorder %s72, %s73
      %p87 = scmp.eq.s32.totalorder %s25, 1
      %p88 = por %p86, %p87
      %p90 = scmp.ne.s32.totalorder %s73, %s89
      %p91 = scmp.eq.s32.totalorder %s25, 0
      %p92 = por %p90, %p91
      %s93 = ssub.s32 %s26, %s38
      %p94 = scmp.eq.s32.totalorder %s93, 0
      %s96 = sadd.s32 %s95, 1
      %s97 = scalar_select %p94, %s95, %s96
      %p100 = pneg %p94
      %p101 = scmp.eq.s32.totalorder %s19, 1
      %p102 = por %p100, %p101
      %p103 = scmp.ne.s32.totalorder %s95, %s98
      %p104 = scmp.eq.s32.totalorder %s19, 0
      %p105 = por %p103, %p104
      %p106 = scmp.ne.s32.totalorder %s95, %s98
      %p107 = scmp.eq.s32.totalorder %s24, 1
      %p108 = por %p106, %p107
      %p109 = scmp.ne.s32.totalorder %s98, %s99
      %p110 = scmp.eq.s32.totalorder %s24, 0
      %p111 = por %p109, %p110
      %p112 = scmp.ne.s32.totalorder %s98, %s99
      %p113 = scmp.eq.s32.totalorder %s25, 1
      %p114 = por %p112, %p113
      %p116 = scmp.ne.s32.totalorder %s99, %s115
      %p117 = scmp.eq.s32.totalorder %s25, 0
      %p118 = por %p116, %p117
      %s120 = sadd.s32 %s119, 1
      %p123 = scmp.eq.s32.totalorder %s19, 1
      %p124 = scmp.ne.s32.totalorder %s119, %s121
      %p125 = scmp.eq.s32.totalorder %s19, 0
      %p126 = por %p124, %p125
      %p127 = scmp.ne.s32.totalorder %s119, %s121
      %p128 = scmp.eq.s32.totalorder %s24, 1
      %p129 = por %p127, %p128
      %p130 = scmp.ne.s32.totalorder %s121, %s122
      %p131 = scmp.eq.s32.totalorder %s24, 0
      %p132 = por %p130, %p131
      %p133 = scmp.ne.s32.totalorder %s121, %s122
      %p134 = scmp.eq.s32.totalorder %s25, 1
      %p135 = por %p133, %p134
      %p137 = scmp.ne.s32.totalorder %s122, %s136
      %p138 = scmp.eq.s32.totalorder %s25, 0
      %p139 = por %p137, %p138
      %s141 = sadd.s32 %s140, 1
      %p144 = scmp.eq.s32.totalorder %s19, 1
      %p145 = scmp.ne.s32.totalorder %s140, %s142
      %p146 = scmp.eq.s32.totalorder %s19, 0
      %p147 = por %p145, %p146
      %p148 = scmp.ne.s32.totalorder %s140, %s142
      %p149 = scmp.eq.s32.totalorder %s24, 1
      %p150 = por %p148, %p149
      %p151 = scmp.ne.s32.totalorder %s142, %s143
      %p152 = scmp.eq.s32.totalorder %s24, 0
      %p153 = por %p151, %p152
      %p154 = scmp.ne.s32.totalorder %s142, %s143
      %p155 = scmp.eq.s32.totalorder %s25, 1
      %p156 = por %p154, %p155
      %p158 = scmp.ne.s32.totalorder %s143, %s157
      %p159 = scmp.eq.s32.totalorder %s25, 0
      %p160 = por %p158, %p159
      %s162 = sadd.s32 %s161, 1
      %p165 = scmp.eq.s32.totalorder %s19, 1
      %p166 = scmp.ne.s32.totalorder %s161, %s163
      %p167 = scmp.eq.s32.totalorder %s19, 0
      %p168 = por %p166, %p167
      %p169 = scmp.ne.s32.totalorder %s161, %s163
      %p170 = scmp.eq.s32.totalorder %s24, 1
      %p171 = por %p169, %p170
      %p172 = scmp.ne.s32.totalorder %s163, %s164
      %p173 = scmp.eq.s32.totalorder %s24, 0
      %p174 = por %p172, %p173
      %p175 = scmp.ne.s32.totalorder %s163, %s164
      %p176 = scmp.eq.s32.totalorder %s25, 1
      %p177 = por %p175, %p176
      %p179 = scmp.ne.s32.totalorder %s164, %s178
      %p180 = scmp.eq.s32.totalorder %s25, 0
      %p181 = por %p179, %p180
      %s183 = sadd.s32 %s182, 1
      %p186 = scmp.eq.s32.totalorder %s19, 1
      %p187 = scmp.ne.s32.totalorder %s182, %s184
      %p188 = scmp.eq.s32.totalorder %s19, 0
      %p189 = por %p187, %p188
      %p190 = scmp.ne.s32.totalorder %s182, %s184
      %p191 = scmp.eq.s32.totalorder %s24, 1
      %p192 = por %p190, %p191
      %p193 = scmp.ne.s32.totalorder %s184, %s185
      %p194 = scmp.eq.s32.totalorder %s24, 0
      %p195 = por %p193, %p194
      %p196 = scmp.ne.s32.totalorder %s184, %s185
      %p197 = scmp.eq.s32.totalorder %s25, 1
      %p198 = por %p196, %p197
      %p200 = scmp.ne.s32.totalorder %s185, %s199
      %p201 = scmp.eq.s32.totalorder %s25, 0
      %p202 = por %p200, %p201
      %s204 = sadd.s32 %s203, 1
      %p207 = scmp.eq.s32.totalorder %s19, 1
      %p208 = scmp.ne.s32.totalorder %s203, %s205
      %p209 = scmp.eq.s32.totalorder %s19, 0
      %p210 = por %p208, %p209
      %p211 = scmp.ne.s32.totalorder %s203, %s205
      %p212 = scmp.eq.s32.totalorder %s24, 1
      %p213 = por %p211, %p212
      %p214 = scmp.ne.s32.totalorder %s205, %s206
      %p215 = scmp.eq.s32.totalorder %s24, 0
      %p216 = por %p214, %p215
      %p217 = scmp.ne.s32.totalorder %s205, %s206
      %p218 = scmp.eq.s32.totalorder %s25, 1
      %p219 = por %p217, %p218
      %p221 = scmp.ne.s32.totalorder %s206, %s220
      %p222 = scmp.eq.s32.totalorder %s25, 0
      %p223 = por %p221, %p222
      %s224 = ssub.s32 %s26, %s38
      %s225 = ssub.s32 %s27, %s34
      %s226 = sor.u32 %s224, %s225
      %p227 = scmp.eq.s32.totalorder %s226, 0
      %s229 = sadd.s32 %s228, 1
      %s230 = scalar_select %p227, %s228, %s229
      %p233 = pneg %p227
      %p234 = scmp.eq.s32.totalorder %s19, 1
      %p235 = por %p233, %p234
      %p236 = scmp.ne.s32.totalorder %s228, %s231
      %p237 = scmp.eq.s32.totalorder %s19, 0
      %p238 = por %p236, %p237
      %p239 = scmp.ne.s32.totalorder %s228, %s231
      %p240 = scmp.eq.s32.totalorder %s24, 1
      %p241 = por %p239, %p240
      %p242 = scmp.ne.s32.totalorder %s231, %s232
      %p243 = scmp.eq.s32.totalorder %s24, 0
      %p244 = por %p242, %p243
      %p245 = scmp.ne.s32.totalorder %s231, %s232
      %p246 = scmp.eq.s32.totalorder %s25, 1
      %p247 = por %p245, %p246
      %p249 = scmp.ne.s32.totalorder %s232, %s248
      %p250 = scmp.eq.s32.totalorder %s25, 0
      %p251 = por %p249, %p250
      %p252 = scmp.le.s32.totalorder 1, %s19
      %p253 = scmp.lt.s32.totalorder %s19, 3
      %p254 = pnand %p252, %p253
      %p255 = pneg %p254
      // Predicated region
      $region9: #{tpu_custom_call.1} parent=5 // pred_check
        _
      $region10: #{tpu_custom_call.1} parent=5 // pred_check_branch
        %257 = sbr.rel (%p254) target = $region12
      $region11: #{tpu_custom_call.1} parent=5 // pred_region
        %s258 = ssub.s32 %s19, 1
        // Predicated region
        $region13: #{tpu_custom_call.1} parent=11 // pred_check
          %p259 = pneg %p132
        $region14: #{tpu_custom_call.1} parent=11 // pred_check_branch
          %261 = sbr.rel (%p259) target = $region16
        $region15: #{tpu_custom_call.1} parent=11 // pred_region
          _
        $region16: #{tpu_custom_call.1} parent=11 // pred_fallthru
          _
        // Predicated region
        $region17: #{tpu_custom_call.1} parent=11 // pred_check
          %p262 = pneg %p153
        $region18: #{tpu_custom_call.1} parent=11 // pred_check_branch
          %264 = sbr.rel (%p262) target = $region20
        $region19: #{tpu_custom_call.1} parent=11 // pred_region
          %266 = vsyncadd [#allocation3], 0
          %s267 = sshll.u32 %s4, 4
          %s268 = int_to_ptr.hbm [resolvable:$true] %s267
          %s269 = sshll.u32 [#allocation2], 4
          %s270 = int_to_ptr.vmem [resolvable:$true] %s269
          %275 = dma.hbm_to_vmem [thread:$0]  %s268, 1024, %s270, [#allocation3], 64, 64, 4
        $region20: #{tpu_custom_call.1} parent=11 // pred_fallthru
          _
        // Predicated region
        $region21: #{tpu_custom_call.1} parent=11 // pred_check
          %p276 = pneg %p174
        $region22: #{tpu_custom_call.1} parent=11 // pred_check_branch
          %278 = sbr.rel (%p276) target = $region24
        $region23: #{tpu_custom_call.1} parent=11 // pred_region
          %280 = vsyncadd [#allocation6], 0
          %s281 = sshll.u32 %s5, 4
          %s282 = int_to_ptr.hbm [resolvable:$true] %s281
          %s283 = sshll.u32 [#allocation5], 4
          %s284 = int_to_ptr.vmem [resolvable:$true] %s283
          %289 = dma.hbm_to_vmem [thread:$0]  %s282, 1024, %s284, [#allocation6], 64, 64, 4
        $region24: #{tpu_custom_call.1} parent=11 // pred_fallthru
          _
        // Predicated region
        $region25: #{tpu_custom_call.1} parent=11 // pred_check
          %p290 = pneg %p195
        $region26: #{tpu_custom_call.1} parent=11 // pred_check_branch
          %292 = sbr.rel (%p290) target = $region28
        $region27: #{tpu_custom_call.1} parent=11 // pred_region
          %294 = vsyncadd [#allocation6], 0
          %s295 = sshll.u32 %s6, 4
          %s296 = int_to_ptr.hbm [resolvable:$true] %s295
          %s297 = sshll.u32 [#allocation7], 4
          %s298 = int_to_ptr.vmem [resolvable:$true] %s297
          %303 = dma.hbm_to_vmem [thread:$0]  %s296, 1024, %s298, [#allocation6], 64, 64, 4
        $region28: #{tpu_custom_call.1} parent=11 // pred_fallthru
          _
        // Predicated region
        $region29: #{tpu_custom_call.1} parent=11 // pred_check
          %p304 = pneg %p216
        $region30: #{tpu_custom_call.1} parent=11 // pred_check_branch
          %306 = sbr.rel (%p304) target = $region32
        $region31: #{tpu_custom_call.1} parent=11 // pred_region
          _
        $region32: #{tpu_custom_call.1} parent=11 // pred_fallthru
          _
      $region12: #{tpu_custom_call.1} parent=5 // pred_fallthru
        _
      %p307 = scmp.lt.s32.totalorder %s19, 2
      // Predicated region
      $region33: #{tpu_custom_call.1} parent=5 // pred_check
        %p308 = pneg %p307
      $region34: #{tpu_custom_call.1} parent=5 // pred_check_branch
        %310 = sbr.rel (%p308) target = $region36
      $region35: #{tpu_custom_call.1} parent=5 // pred_region
        // Predicated region
        $region37: #{tpu_custom_call.1} parent=35 // pred_check
          %p311 = pneg %p53
        $region38: #{tpu_custom_call.1} parent=35 // pred_check_branch
          %313 = sbr.rel (%p311) target = $region40
        $region39: #{tpu_custom_call.1} parent=35 // pred_region
          %p314 = scmp.lt.s32.totalorder %s26, 1
          %s315 = scalar_select %p314, %s26, 1
          %p316 = scmp.lt.s32.totalorder %s27, 0
          %s317 = scalar_select %p316, %s27, 0
          %s318 = sadd.s32 %s317, %s315
          %s319 = smul.addr %s318, 8
          %s320 = scalar_lea.vmem %s0, %s319
        $region40: #{tpu_custom_call.1} parent=35 // pred_fallthru
          _
        // Predicated region
        $region41: #{tpu_custom_call.1} parent=35 // pred_check
          %p321 = pneg %p79
        $region42: #{tpu_custom_call.1} parent=35 // pred_check_branch
          %323 = sbr.rel (%p321) target = $region44
        $region43: #{tpu_custom_call.1} parent=35 // pred_region
          %p324 = scmp.lt.s32.totalorder %s26, 1
          %s325 = scalar_select %p324, %s26, 1
          %s326 = smul.addr %s325, 4
          %s327 = scalar_lea.vmem %s1, %s326
        $region44: #{tpu_custom_call.1} parent=35 // pred_fallthru
          _
        // Predicated region
        $region45: #{tpu_custom_call.1} parent=35 // pred_check
          %p328 = pneg %p105
        $region46: #{tpu_custom_call.1} parent=35 // pred_check_branch
          %330 = sbr.rel (%p328) target = $region48
        $region47: #{tpu_custom_call.1} parent=35 // pred_region
          %p331 = scmp.lt.s32.totalorder %s26, 1
          %s332 = scalar_select %p331, %s26, 1
          %s333 = smul.addr %s332, 4
          %s334 = scalar_lea.vmem %s2, %s333
        $region48: #{tpu_custom_call.1} parent=35 // pred_fallthru
          _
      $region36: #{tpu_custom_call.1} parent=5 // pred_fallthru
        _
      %p335 = scmp.le.s32.totalorder 1, %s19
      %p336 = scmp.lt.s32.totalorder %s19, 3
      %p337 = pnand %p335, %p336
      %p338 = pneg %p337
      // Predicated region
      $region49: #{tpu_custom_call.1} parent=5 // pred_check
        _
      $region50: #{tpu_custom_call.1} parent=5 // pred_check_branch
        %340 = sbr.rel (%p337) target = $region52
      $region51: #{tpu_custom_call.1} parent=5 // pred_region
        %s341 = ssub.s32 %s19, 1
        // Predicated region
        $region53: #{tpu_custom_call.1} parent=51 // pred_check
          %p342 = pneg %p153
        $region54: #{tpu_custom_call.1} parent=51 // pred_check_branch
          %344 = sbr.rel (%p342) target = $region56
        $region55: #{tpu_custom_call.1} parent=51 // pred_region
          %346 = dma.done [#allocation3], 1024
        $region56: #{tpu_custom_call.1} parent=51 // pred_fallthru
          _
        // Predicated region
        $region57: #{tpu_custom_call.1} parent=51 // pred_check
          %p347 = pneg %p174
        $region58: #{tpu_custom_call.1} parent=51 // pred_check_branch
          %349 = sbr.rel (%p347) target = $region60
        $region59: #{tpu_custom_call.1} parent=51 // pred_region
          %351 = dma.done [#allocation6], 1024
        $region60: #{tpu_custom_call.1} parent=51 // pred_fallthru
          _
        // Predicated region
        $region61: #{tpu_custom_call.1} parent=51 // pred_check
          %p352 = pneg %p195
        $region62: #{tpu_custom_call.1} parent=51 // pred_check_branch
          %354 = sbr.rel (%p352) target = $region64
        $region63: #{tpu_custom_call.1} parent=51 // pred_region
          %356 = dma.done [#allocation6], 1024
        $region64: #{tpu_custom_call.1} parent=51 // pred_fallthru
          _
        %p357 = scmp.lt.s32.totalorder %s28, 1
        %s358 = scalar_select %p357, %s28, 1
        %p359 = scmp.lt.s32.totalorder %s29, 0
        %s360 = scalar_select %p359, %s29, 0
        %s361 = sadd.s32 %s360, %s358
        %s362 = smul.addr %s361, 8
        %s363 = scalar_lea.vmem %s0, %s362
        %p364 = pneg %p59
        %p365 = pneg %p56
        %p366 = scmp.lt.s32.totalorder %s28, 1
        %s367 = scalar_select %p366, %s28, 1
        %s368 = smul.addr %s367, 4
        %s369 = scalar_lea.vmem %s1, %s368
        %p370 = pneg %p85
        %p371 = pneg %p82
        %p372 = scmp.lt.s32.totalorder %s28, 1
        %s373 = scalar_select %p372, %s28, 1
        %s374 = smul.addr %s373, 4
        %s375 = scalar_lea.vmem %s2, %s374
        %p376 = pneg %p111
        %p377 = pneg %p108
        %p378 = pneg %p132
        %p379 = pneg %p129
        %p380 = pneg %p153
        %p381 = pneg %p150
        %p382 = pneg %p174
        %p383 = pneg %p171
        %p384 = pneg %p195
        %p385 = pneg %p192
        %p386 = pneg %p216
        %p387 = pneg %p213
        %p388 = pneg %p244
        %p389 = pneg %p241
        %s390 = sand.u32 %s231, 1
        %s391 = scalar_lea.sflag [#allocation4], %s390
        %s392 = sand.u32 %s231, 1
        %s393 = smul.addr %s392, 8
        %s394 = scalar_lea.vmem [#allocation8], %s393
        %p395 = scmp.lt.s32.totalorder %s28, 1
        %s396 = scalar_select %p395, %s28, 1
        %p397 = scmp.lt.s32.totalorder %s29, 0
        %s398 = scalar_select %p397, %s29, 0
        %s399 = sadd.s32 %s398, %s396
        %s400 = smul.addr %s399, 8
        %s401 = scalar_lea.vmem %s0, %s400
        %p402 = scmp.lt.s32.totalorder %s28, 1
        %s403 = scalar_select %p402, %s28, 1
        %s404 = smul.addr %s403, 4
        %s405 = scalar_lea.vmem %s1, %s404
        %p406 = scmp.lt.s32.totalorder %s28, 1
        %s407 = scalar_select %p406, %s28, 1
        %s408 = smul.addr %s407, 4
        %s409 = scalar_lea.vmem %s2, %s408
        %v410 = vld [vmem:[%s405] sm:$0x7]
        %v411 = vld [vmem:[%s409] sm:$0x7]
        %v412 = vld [vmem:[%s401] sm:$0xff]
        %v413 = vld [vmem:[%s3] sm:$0x7]
        %415 = vset.pattern.permute.xlu0 0
        %416 = vperm.xlu0 %415, %v412
        %v417 = vpop.permute.xlu0 %416
        %v419 = vperm.slane %v413, 0
        %v420 = vmul.f32 %v417, %v419
        %421 = vset.pattern.permute.xlu0 1
        %422 = vperm.xlu0 %421, %v412
        %v423 = vpop.permute.xlu0 %422
        %v425 = vperm.slane %v413, 1
        %v426 = vmul.f32 %v423, %v425
        %v427 = vadd.f32 %v420, %v426
        %428 = vset.pattern.permute.xlu0 2
        %429 = vperm.xlu0 %428, %v412
        %v430 = vpop.permute.xlu0 %429
        %v432 = vperm.slane %v413, 2
        %v433 = vmul.f32 %v430, %v432
        %v434 = vadd.f32 %v427, %v433
        %v435 = vperm.slane %v410, 0
        %v436 = vmul.f32 %v434, %v435
        %v437 = vperm.slane %v411, 0
        %v438 = vadd.f32 %v436, %v437
        %v439 = vadd.f32 %v438, 0.5
        %v440 = vfloor.f32 %v439
        %v441 = vsub.f32 %v438, %v440
        %vm442 = vcmp.gt.f32.partialorder %v441, 0.25
        %v443 = vsub.f32 0.5, %v441
        %v444 = vsel %vm442, %v443, %v441
        %vm445 = vcmp.lt.f32.partialorder %v444, -0.25
        %v446 = vsub.f32 -0.5, %v444
        %v447 = vsel %vm445, %v446, %v444
        %v448 = vpack.c.bf16 %v447, %v447
        %v449 = vunpack.c.l.bf16 %v448
        %v450 = vmul.f32 %v449, 6.28125
        %v451 = vpack.c.bf16 %v450, %v450
        %v452 = vunpack.c.l.bf16 %v451
        %v453 = vmul.f32 %v452, %v452
        %v454 = vpack.c.bf16 %v453, %v453
        %v455 = vunpack.c.l.bf16 %v454
        %v456 = vmul.f32 %v455, -0.00019550323
        %v457 = vpack.c.bf16 %v456, %v456
        %v458 = vunpack.c.l.bf16 %v457
        %v459 = vadd.f32 %v458, 0.008361816
        %v460 = vpack.c.bf16 %v459, %v459
        %v461 = vunpack.c.l.bf16 %v460
        %v462 = vmul.f32 %v455, %v461
        %v463 = vpack.c.bf16 %v462, %v462
        %v464 = vunpack.c.l.bf16 %v463
        %v465 = vadd.f32 %v464, -0.16699219
        %v466 = vpack.c.bf16 %v465, %v465
        %v467 = vunpack.c.l.bf16 %v466
        %v468 = vmul.f32 %v455, %v467
        %v469 = vpack.c.bf16 %v468, %v468
        %v470 = vunpack.c.l.bf16 %v469
        %v471 = vmul.f32 %v452, %v470
        %v472 = vpack.c.bf16 %v471, %v471
        %v473 = vunpack.c.l.bf16 %v472
        %v474 = vadd.f32 %v452, %v473
        %v475 = vpack.c.bf16 %v474, %v474
        %v476 = vld [vmem:[#allocation2] sm:$0xf]
        %v477 = vld [vmem:[#allocation2 + $0x4] sm:$0xf]
        %v478 = vld [vmem:[#allocation2 + $0x8] sm:$0xf]
        %v479 = vld [vmem:[#allocation2 + $0xc] sm:$0xf]
        %v480 = vld [vmem:[#allocation2 + $0x10] sm:$0xf]
        %v481 = vld [vmem:[#allocation2 + $0x14] sm:$0xf]
        %v482 = vld [vmem:[#allocation2 + $0x18] sm:$0xf]
        %v483 = vld [vmem:[#allocation2 + $0x1c] sm:$0xf]
        %v484 = vld [vmem:[#allocation2 + $0x20] sm:$0xf]
        %v485 = vld [vmem:[#allocation2 + $0x24] sm:$0xf]
        %v486 = vld [vmem:[#allocation2 + $0x28] sm:$0xf]
        %v487 = vld [vmem:[#allocation2 + $0x2c] sm:$0xf]
        %v488 = vld [vmem:[#allocation2 + $0x30] sm:$0xf]
        %v489 = vld [vmem:[#allocation2 + $0x34] sm:$0xf]
        %v490 = vld [vmem:[#allocation2 + $0x38] sm:$0xf]
        %v491 = vld [vmem:[#allocation2 + $0x3c] sm:$0xf]
        %v508 = vunpack.c.l.b16 %v476
        %v509 = vunpack.c.l.b16 %v477
        %v510 = vunpack.c.l.b16 %v478
        %v511 = vunpack.c.l.b16 %v479
        %v512 = vunpack.c.l.b16 %v480
        %v513 = vunpack.c.l.b16 %v481
        %v514 = vunpack.c.l.b16 %v482
        %v515 = vunpack.c.l.b16 %v483
        %v516 = vunpack.c.l.b16 %v484
        %v517 = vunpack.c.l.b16 %v485
        %v518 = vunpack.c.l.b16 %v486
        %v519 = vunpack.c.l.b16 %v487
        %v520 = vunpack.c.l.b16 %v488
        %v521 = vunpack.c.l.b16 %v489
        %v522 = vunpack.c.l.b16 %v490
        %v523 = vunpack.c.l.b16 %v491
        %v524 = vpack.c.b16 %v509, %v508
        %v525 = vpack.c.b16 %v511, %v510
        %v526 = vpack.c.b16 %v513, %v512
        %v527 = vpack.c.b16 %v515, %v514
        %v528 = vpack.c.b16 %v517, %v516
        %v529 = vpack.c.b16 %v519, %v518
        %v530 = vpack.c.b16 %v521, %v520
        %v531 = vpack.c.b16 %v523, %v522
        %540 = vmatpush.bf16.msra.mxu0 %v531
        %541 = vmatpush.bf16.msra.mxu0 %v530
        %542 = vmatpush.bf16.msra.mxu0 %v529
        %543 = vmatpush.bf16.msra.mxu0 %v528
        %544 = vmatpush.bf16.msra.mxu0 %v527
        %545 = vmatpush.bf16.msra.mxu0 %v526
        %546 = vmatpush.bf16.msra.mxu0 %v525
        %547 = vmatpush.bf16.msra.mxu0 %v524
        %548 = vmatmul.bf16.gmra.mxu0 %v475
        %v549 = vpop.f32.mrf.mxu0
        %v550 = vadd.f32 0.0, %v549
        %v551 = vpop.f32.mrf.mxu0
        %552 = vdwg.mxu0
        %v553 = vperm.slane %v410, 1
        %v554 = vmul.f32 %v550, %v553
        %v555 = vperm.slane %v411, 1
        %v556 = vadd.f32 %v554, %v555
        %v557 = vadd.f32 %v556, 0.5
        %v558 = vfloor.f32 %v557
        %v559 = vsub.f32 %v556, %v558
        %vm560 = vcmp.gt.f32.partialorder %v559, 0.25
        %v561 = vsub.f32 0.5, %v559
        %v562 = vsel %vm560, %v561, %v559
        %vm563 = vcmp.lt.f32.partialorder %v562, -0.25
        %v564 = vsub.f32 -0.5, %v562
        %v565 = vsel %vm563, %v564, %v562
        %v566 = vpack.c.bf16 %v565, %v565
        %v567 = vunpack.c.l.bf16 %v566
        %v568 = vmul.f32 %v567, 6.28125
        %v569 = vpack.c.bf16 %v568, %v568
        %v570 = vunpack.c.l.bf16 %v569
        %v571 = vmul.f32 %v570, %v570
        %v572 = vpack.c.bf16 %v571, %v571
        %v573 = vunpack.c.l.bf16 %v572
        %v574 = vmul.f32 %v573, -0.00019550323
        %v575 = vpack.c.bf16 %v574, %v574
        %v576 = vunpack.c.l.bf16 %v575
        %v577 = vadd.f32 %v576, 0.008361816
        %v578 = vpack.c.bf16 %v577, %v577
        %v579 = vunpack.c.l.bf16 %v578
        %v580 = vmul.f32 %v573, %v579
        %v581 = vpack.c.bf16 %v580, %v580
        %v582 = vunpack.c.l.bf16 %v581
        %v583 = vadd.f32 %v582, -0.16699219
        %v584 = vpack.c.bf16 %v583, %v583
        %v585 = vunpack.c.l.bf16 %v584
        %v586 = vmul.f32 %v573, %v585
        %v587 = vpack.c.bf16 %v586, %v586
        %v588 = vunpack.c.l.bf16 %v587
        %v589 = vmul.f32 %v570, %v588
        %v590 = vpack.c.bf16 %v589, %v589
        %v591 = vunpack.c.l.bf16 %v590
        %v592 = vadd.f32 %v570, %v591
        %v593 = vpack.c.bf16 %v592, %v592
        %v594 = vld [vmem:[#allocation5] sm:$0xf]
        %v595 = vld [vmem:[#allocation5 + $0x4] sm:$0xf]
        %v596 = vld [vmem:[#allocation5 + $0x8] sm:$0xf]
        %v597 = vld [vmem:[#allocation5 + $0xc] sm:$0xf]
        %v598 = vld [vmem:[#allocation5 + $0x10] sm:$0xf]
        %v599 = vld [vmem:[#allocation5 + $0x14] sm:$0xf]
        %v600 = vld [vmem:[#allocation5 + $0x18] sm:$0xf]
        %v601 = vld [vmem:[#allocation5 + $0x1c] sm:$0xf]
        %v602 = vld [vmem:[#allocation5 + $0x20] sm:$0xf]
        %v603 = vld [vmem:[#allocation5 + $0x24] sm:$0xf]
        %v604 = vld [vmem:[#allocation5 + $0x28] sm:$0xf]
        %v605 = vld [vmem:[#allocation5 + $0x2c] sm:$0xf]
        %v606 = vld [vmem:[#allocation5 + $0x30] sm:$0xf]
        %v607 = vld [vmem:[#allocation5 + $0x34] sm:$0xf]
        %v608 = vld [vmem:[#allocation5 + $0x38] sm:$0xf]
        %v609 = vld [vmem:[#allocation5 + $0x3c] sm:$0xf]
        %v626 = vunpack.c.l.b16 %v594
        %v627 = vunpack.c.l.b16 %v595
        %v628 = vunpack.c.l.b16 %v596
        %v629 = vunpack.c.l.b16 %v597
        %v630 = vunpack.c.l.b16 %v598
        %v631 = vunpack.c.l.b16 %v599
        %v632 = vunpack.c.l.b16 %v600
        %v633 = vunpack.c.l.b16 %v601
        %v634 = vunpack.c.l.b16 %v602
        %v635 = vunpack.c.l.b16 %v603
        %v636 = vunpack.c.l.b16 %v604
        %v637 = vunpack.c.l.b16 %v605
        %v638 = vunpack.c.l.b16 %v606
        %v639 = vunpack.c.l.b16 %v607
        %v640 = vunpack.c.l.b16 %v608
        %v641 = vunpack.c.l.b16 %v609
        %v642 = vpack.c.b16 %v627, %v626
        %v643 = vpack.c.b16 %v629, %v628
        %v644 = vpack.c.b16 %v631, %v630
        %v645 = vpack.c.b16 %v633, %v632
        %v646 = vpack.c.b16 %v635, %v634
        %v647 = vpack.c.b16 %v637, %v636
        %v648 = vpack.c.b16 %v639, %v638
        %v649 = vpack.c.b16 %v641, %v640
        %658 = vmatpush.bf16.msra.mxu0 %v649
        %659 = vmatpush.bf16.msra.mxu0 %v648
        %660 = vmatpush.bf16.msra.mxu0 %v647
        %661 = vmatpush.bf16.msra.mxu0 %v646
        %662 = vmatpush.bf16.msra.mxu0 %v645
        %663 = vmatpush.bf16.msra.mxu0 %v644
        %664 = vmatpush.bf16.msra.mxu0 %v643
        %665 = vmatpush.bf16.msra.mxu0 %v642
        %666 = vmatmul.bf16.gmra.mxu0 %v593
        %v667 = vpop.f32.mrf.mxu0
        %v668 = vadd.f32 0.0, %v667
        %v669 = vpop.f32.mrf.mxu0
        %670 = vdwg.mxu0
        %v671 = vperm.slane %v410, 2
        %v672 = vmul.f32 %v668, %v671
        %v673 = vperm.slane %v411, 2
        %v674 = vadd.f32 %v672, %v673
        %v675 = vadd.f32 %v674, 0.5
        %v676 = vfloor.f32 %v675
        %v677 = vsub.f32 %v674, %v676
        %vm678 = vcmp.gt.f32.partialorder %v677, 0.25
        %v679 = vsub.f32 0.5, %v677
        %v680 = vsel %vm678, %v679, %v677
        %vm681 = vcmp.lt.f32.partialorder %v680, -0.25
        %v682 = vsub.f32 -0.5, %v680
        %v683 = vsel %vm681, %v682, %v680
        %v684 = vpack.c.bf16 %v683, %v683
        %v685 = vunpack.c.l.bf16 %v684
        %v686 = vmul.f32 %v685, 6.28125
        %v687 = vpack.c.bf16 %v686, %v686
        %v688 = vunpack.c.l.bf16 %v687
        %v689 = vmul.f32 %v688, %v688
        %v690 = vpack.c.bf16 %v689, %v689
        %v691 = vunpack.c.l.bf16 %v690
        %v692 = vmul.f32 %v691, -0.00019550323
        %v693 = vpack.c.bf16 %v692, %v692
        %v694 = vunpack.c.l.bf16 %v693
        %v695 = vadd.f32 %v694, 0.008361816
        %v696 = vpack.c.bf16 %v695, %v695
        %v697 = vunpack.c.l.bf16 %v696
        %v698 = vmul.f32 %v691, %v697
        %v699 = vpack.c.bf16 %v698, %v698
        %v700 = vunpack.c.l.bf16 %v699
        %v701 = vadd.f32 %v700, -0.16699219
        %v702 = vpack.c.bf16 %v701, %v701
        %v703 = vunpack.c.l.bf16 %v702
        %v704 = vmul.f32 %v691, %v703
        %v705 = vpack.c.bf16 %v704, %v704
        %v706 = vunpack.c.l.bf16 %v705
        %v707 = vmul.f32 %v688, %v706
        %v708 = vpack.c.bf16 %v707, %v707
        %v709 = vunpack.c.l.bf16 %v708
        %v710 = vadd.f32 %v688, %v709
        %v711 = vpack.c.bf16 %v710, %v710
        %v712 = vld [vmem:[#allocation7] sm:$0xf]
        %v713 = vld [vmem:[#allocation7 + $0x4] sm:$0xf]
        %v714 = vld [vmem:[#allocation7 + $0x8] sm:$0xf]
        %v715 = vld [vmem:[#allocation7 + $0xc] sm:$0xf]
        %v716 = vld [vmem:[#allocation7 + $0x10] sm:$0xf]
        %v717 = vld [vmem:[#allocation7 + $0x14] sm:$0xf]
        %v718 = vld [vmem:[#allocation7 + $0x18] sm:$0xf]
        %v719 = vld [vmem:[#allocation7 + $0x1c] sm:$0xf]
        %v720 = vld [vmem:[#allocation7 + $0x20] sm:$0xf]
        %v721 = vld [vmem:[#allocation7 + $0x24] sm:$0xf]
        %v722 = vld [vmem:[#allocation7 + $0x28] sm:$0xf]
        %v723 = vld [vmem:[#allocation7 + $0x2c] sm:$0xf]
        %v724 = vld [vmem:[#allocation7 + $0x30] sm:$0xf]
        %v725 = vld [vmem:[#allocation7 + $0x34] sm:$0xf]
        %v726 = vld [vmem:[#allocation7 + $0x38] sm:$0xf]
        %v727 = vld [vmem:[#allocation7 + $0x3c] sm:$0xf]
        %v728 = vld [vmem:[%s7] sm:$0x1]
        %v730 = vperm.slane %v728, 0
        %v748 = vunpack.c.l.b16 %v712
        %v749 = vunpack.c.l.b16 %v713
        %v750 = vunpack.c.l.b16 %v714
        %v751 = vunpack.c.l.b16 %v715
        %v752 = vunpack.c.l.b16 %v716
        %v753 = vunpack.c.l.b16 %v717
        %v754 = vunpack.c.l.b16 %v718
        %v755 = vunpack.c.l.b16 %v719
        %v756 = vunpack.c.l.b16 %v720
        %v757 = vunpack.c.l.b16 %v721
        %v758 = vunpack.c.l.b16 %v722
        %v759 = vunpack.c.l.b16 %v723
        %v760 = vunpack.c.l.b16 %v724
        %v761 = vunpack.c.l.b16 %v725
        %v762 = vunpack.c.l.b16 %v726
        %v763 = vunpack.c.l.b16 %v727
        %v764 = vpack.c.b16 %v749, %v748
        %v765 = vpack.c.b16 %v751, %v750
        %v766 = vpack.c.b16 %v753, %v752
        %v767 = vpack.c.b16 %v755, %v754
        %v768 = vpack.c.b16 %v757, %v756
        %v769 = vpack.c.b16 %v759, %v758
        %v770 = vpack.c.b16 %v761, %v760
        %v771 = vpack.c.b16 %v763, %v762
        %780 = vmatpush.bf16.msra.mxu0 %v771
        %781 = vmatpush.bf16.msra.mxu0 %v770
        %782 = vmatpush.bf16.msra.mxu0 %v769
        %783 = vmatpush.bf16.msra.mxu0 %v768
        %784 = vmatpush.bf16.msra.mxu0 %v767
        %785 = vmatpush.bf16.msra.mxu0 %v766
        %786 = vmatpush.bf16.msra.mxu0 %v765
        %787 = vmatpush.bf16.msra.mxu0 %v764
        %788 = vmatmul.bf16.gmra.mxu0 %v711
        %v789 = vpop.f32.mrf.mxu0
        %v790 = vadd.f32 %v730, %v789
        %v791 = vpop.f32.mrf.mxu0
        %792 = vdwg.mxu0
        %793 = vst [vmem:[%s394] sm:$0xff] %v790
        %s794 = sand.u32 %s231, 1
        %s795 = scalar_lea.sflag [#allocation4], %s794
        %s796 = sand.u32 %s231, 1
        %s797 = smul.addr %s796, 8
        %s798 = scalar_lea.vmem [#allocation8], %s797
        // Predicated region
        $region65: #{tpu_custom_call.1} parent=51 // pred_check
          %p799 = pneg %p241
        $region66: #{tpu_custom_call.1} parent=51 // pred_check_branch
          %801 = sbr.rel (%p799) target = $region68
        $region67: #{tpu_custom_call.1} parent=51 // pred_region
          %803 = vsyncadd %s795, 0
          %s804 = sadd.s32 %s29, %s28
          %s805 = smul.addr %s804, 8
          %s806 = scalar_lea.hbm %s8, %s805
          %s808 = sshll.u32 %s798, 4
          %s809 = int_to_ptr.vmem [resolvable:$true] %s808
          %s810 = sshll.u32 %s806, 4
          %s811 = int_to_ptr.hbm [resolvable:$true] %s810
          %813 = dma.vmem_to_hbm [thread:$0]  %s809, 128, %s811, %s795
        $region68: #{tpu_custom_call.1} parent=51 // pred_fallthru
          _
      $region52: #{tpu_custom_call.1} parent=5 // pred_fallthru
        _
      %p814 = scmp.le.s32.totalorder 2, %s19
      // Predicated region
      $region69: #{tpu_custom_call.1} parent=5 // pred_check
        %p815 = pneg %p814
      $region70: #{tpu_custom_call.1} parent=5 // pred_check_branch
        %817 = sbr.rel (%p815) target = $region72
      $region71: #{tpu_custom_call.1} parent=5 // pred_region
        %s818 = ssub.s32 %s19, 2
        // Predicated region
        $region73: #{tpu_custom_call.1} parent=71 // pred_check
          %p819 = pneg %p247
        $region74: #{tpu_custom_call.1} parent=71 // pred_check_branch
          %821 = sbr.rel (%p819) target = $region76
        $region75: #{tpu_custom_call.1} parent=71 // pred_region
          %s822 = sand.u32 %s232, 1
          %s823 = scalar_lea.sflag [#allocation4], %s822
          %s824 = sand.u32 %s232, 1
          %s825 = smul.addr %s824, 8
          %s826 = scalar_lea.vmem [#allocation8], %s825
          %828 = dma.done %s823, 128
        $region76: #{tpu_custom_call.1} parent=71 // pred_fallthru
          _
      $region72: #{tpu_custom_call.1} parent=5 // pred_fallthru
        _
    $region6: #{tpu_custom_call.1} parent=1 // loop_footer
      %s23 = sadd.s32 1, %s19
    $region7: #{tpu_custom_call.1} parent=1 // loop_footer_branch
      %18 = sbr.rel target = $region3
    $region8: #{tpu_custom_call.1} parent=1 // loop_exit
      _
    %829 = vsyncpa [#allocation3], 1
    %s830 = scalar_lea.sflag [#allocation3], 1
    %831 = vsyncpa %s830, 1
    %832 = vsyncpa [#allocation6], 1
    %833 = vsyncpa [#allocation4], 1
    %s834 = scalar_lea.sflag [#allocation4], 1
    %835 = vsyncpa %s834, 1

</llo_original>
